<compile_context>
chip_gen: v7x
topology: tpu7x:2x2x1
jax: 0.10.0
libtpu: 0.0.40
codegen_flags: <defaults>
</compile_context>

<pallas_src>
import math

import jax
import jax.numpy as jnp
import numpy as np
from jax.experimental import pallas as pl
from jax.experimental.pallas import tpu as pltpu

# ---- model hyper-parameters (consistent with the nn.Module) ----
VOCAB_SIZE = 256            # synthetic vocab (gpt2 tokenizer not loaded)
EMBED_DIM = 128
NUM_HEADS = 4
HEAD_DIM = EMBED_DIM // NUM_HEADS
FF_DIM = 4 * EMBED_DIM
MEM_SIZE_BASE = 32
THRESHOLD_FACTOR = 1.0
SEQ_LEN = 8
MEM_CAP = 48                # static KV capacity >= MEM_SIZE_BASE + SEQ_LEN, multiple of 16
LN_EPS = 1e-5               # nn.LayerNorm default
ENT_EPS = 1e-8
NEG_INF = -1e30
ATTN_SCALE = 1.0 / math.sqrt(HEAD_DIM)


# =====================================================================
# Pallas kernel: MHA over the fixed-size (masked) KV buffer, residual+LN,
# FFN, residual+LN, vocab projection and the attention-entropy reduction.
# =====================================================================
def _memory_layer_kernel(
    len_ref,                                  # SMEM (1,) int32: valid KV length
    x_ref, kv_ref,                            # (S,E), (MEM_CAP,E) f32
    wq_ref, wk_ref, wv_ref,                   # (E,E) bf16  (wq pre-scaled by 1/sqrt(D))
    bq_ref, bk_ref, bv_ref,                   # (1,E) f32   (bq pre-scaled)
    wo_ref, bo_ref,                           # (E,E) bf16, (1,E) f32
    ln1w_ref, ln1b_ref,
    w1_ref, b1_ref, w2_ref, b2_ref,           # (E,FF)/(FF,E) bf16, f32 biases
    ln2w_ref, ln2b_ref,
    wout_ref, bout_ref,                       # (E,V) bf16, (1,V) f32
    logits_ref, ent_ref,                      # (S,V), (S,128) f32 outputs
):
    x = x_ref[...]                            # (S, E) f32
    kv_len = len_ref[0]
    S = x.shape[0]
    L = kv_ref.shape[0]

    x_bf = x.astype(jnp.bfloat16)
    kv_bf = kv_ref[...].astype(jnp.bfloat16)  # rows >= kv_len are masked in the scores

    # fused full-width Q/K/V projections: bf16 operands straight to the MXU, f32 accumulate
    q = jnp.dot(x_bf, wq_ref[...], preferred_element_type=jnp.float32) + bq_ref[...]   # (S,E)
    k = jnp.dot(kv_bf, wk_ref[...], preferred_element_type=jnp.float32) + bk_ref[...]  # (L,E)
    v = jnp.dot(kv_bf, wv_ref[...], preferred_element_type=jnp.float32) + bv_ref[...]  # (L,E)

    key_pos = jax.lax.broadcasted_iota(jnp.int32, (S, L), 1)
    kmask = key_pos < kv_len                  # (S, L) valid-key mask

    aw_sum = jnp.zeros((S, L), jnp.float32)
    head_outs = []
    # static unroll over heads; only the tiny score / p@v dots are per-head (kept f32 for
    # softmax/entropy accuracy -- they are (S<=8, L<=48, D=32) and never MXU-bound)
    for h in range(NUM_HEADS):
        lo = h * HEAD_DIM
        qh = q[:, lo:lo + HEAD_DIM]           # (S, D)
        kh = k[:, lo:lo + HEAD_DIM]           # (L, D)
        vh = v[:, lo:lo + HEAD_DIM]           # (L, D)

        s = jax.lax.dot_general(qh, kh, (((1,), (1,)), ((), ())),
                                preferred_element_type=jnp.float32)    # (S, L)
        s = jnp.where(kmask, s, NEG_INF)
        m = jnp.max(s, axis=-1, keepdims=True)
        p = jnp.exp(s - m)                    # masked keys underflow to 0
        inv = pl.reciprocal(jnp.sum(p, axis=-1, keepdims=True), approx=True)
        p = p * inv                           # softmax over valid keys
        aw_sum = aw_sum + p
        head_outs.append(jnp.dot(p, vh, preferred_element_type=jnp.float32))  # (S, D)

    head_cat = jnp.concatenate(head_outs, axis=-1)     # (S, E), heads along lanes
    attn = jnp.dot(head_cat.astype(jnp.bfloat16), wo_ref[...],
                   preferred_element_type=jnp.float32) + bo_ref[...]   # (S, E)

    # attention-weight entropy (mean over heads); masked keys contribute exactly 0
    aw = aw_sum * (1.0 / NUM_HEADS)
    ent = -jnp.sum(aw * jnp.log(aw + ENT_EPS), axis=-1, keepdims=True)  # (S, 1)
    ent_ref[...] = jnp.broadcast_to(ent, (S, 128))     # lane-dense entropy slab

    def _layernorm(z, w, b):
        mu = jnp.mean(z, axis=-1, keepdims=True)
        var = jnp.mean((z - mu) * (z - mu), axis=-1, keepdims=True)
        return (z - mu) * jax.lax.rsqrt(var + LN_EPS) * w + b

    x2 = _layernorm(x + attn, ln1w_ref[...], ln1b_ref[...])

    h1 = jnp.dot(x2.astype(jnp.bfloat16), w1_ref[...],
                 preferred_element_type=jnp.float32) + b1_ref[...]
    h1 = jnp.maximum(h1, 0.0)
    ff = jnp.dot(h1.astype(jnp.bfloat16), w2_ref[...],
                 preferred_element_type=jnp.float32) + b2_ref[...]

    out = _layernorm(x2 + ff, ln2w_ref[...], ln2b_ref[...])

    logits_ref[...] = jnp.dot(out.astype(jnp.bfloat16), wout_ref[...],
                              preferred_element_type=jnp.float32) + bout_ref[...]


def _memory_layer_pallas(x_emb, kv_buf, kv_len, p):
    """x_emb (S,E), kv_buf (MEM_CAP,E), kv_len scalar -> logits (S,V), ent (S,)."""
    S = x_emb.shape[0]
    V = p["w_out"].shape[1]
    kv_len_arr = jnp.reshape(kv_len, (1,)).astype(jnp.int32)

    inputs = (
        kv_len_arr, x_emb, kv_buf,
        p["wq"], p["wk"], p["wv"], p["bq"], p["bk"], p["bv"],
        p["wo"], p["bo"],
        p["ln1_w"], p["ln1_b"],
        p["w1"], p["b1"], p["w2"], p["b2"],
        p["ln2_w"], p["ln2_b"],
        p["w_out"], p["b_out"],
    )
    smem = pl.BlockSpec(memory_space=pltpu.MemorySpace.SMEM)
    vmem = pl.BlockSpec(memory_space=pltpu.MemorySpace.VMEM)
    logits, ent_pad = pl.pallas_call(
        _memory_layer_kernel,
        out_shape=(
            jax.ShapeDtypeStruct((S, V), jnp.float32),
            jax.ShapeDtypeStruct((S, 128), jnp.float32),
        ),
        in_specs=[smem] + [vmem] * (len(inputs) - 1),
        out_specs=(vmem, vmem),
    )(*inputs)
    return logits, ent_pad[:, 0]


# =====================================================================
# Static-shape memory compression (entropy threshold / top-k), wrapper side.
# =====================================================================
def _compress_memory(buf, ent_buf, length):
    pos = jnp.arange(MEM_CAP, dtype=jnp.int32)
    valid = pos < length
    lenf = length.astype(jnp.float32)
    mean = jnp.sum(jnp.where(valid, ent_buf, 0.0)) / lenf
    thresh = mean * THRESHOLD_FACTOR
    sel = valid & (ent_buf >= thresh)
    count = jnp.sum(sel.astype(jnp.int32))

    # case A (count <= MEM_SIZE_BASE): keep selected entries, original order (stable)
    perm_a = jnp.argsort(jnp.where(sel, 0, 1), stable=True).astype(jnp.int32)
    # case B (count > MEM_SIZE_BASE): top-k by entropy, descending (torch.topk order)
    masked_ent = jnp.where(valid, ent_buf, -jnp.inf)
    _, top_idx = jax.lax.top_k(masked_ent, MEM_SIZE_BASE)
    perm_b = jnp.concatenate(
        [top_idx.astype(jnp.int32), jnp.zeros((MEM_CAP - MEM_SIZE_BASE,), jnp.int32)])

    use_b = count > MEM_SIZE_BASE
    perm = jnp.where(use_b, perm_b, perm_a)
    new_len = jnp.where(use_b, MEM_SIZE_BASE, count).astype(jnp.int32)

    new_buf = jnp.take(buf, perm, axis=0)
    new_ent = jnp.where(pos < new_len, jnp.take(ent_buf, perm), 0.0)
    return new_buf, new_ent, new_len


# =====================================================================
# All steps under a single jit (lax.scan) -> one dispatch, no host syncs.
# State: mem_buf (MEM_CAP,E), mem_ent_buf (MEM_CAP,) [zero past mem_len], mem_len ().
# =====================================================================
@jax.jit
def transformer_xl_run(params, tokens_all, mem_buf, mem_ent_buf, mem_len):
    # TODO(synk): a grid=(n_steps,) PrefetchScalarGridSpec kernel with VMEM-resident weights
    # would also amortize the per-step weight DMA, but requires moving the top-k compression
    # in-kernel; lax.scan already removes the per-step host dispatch.
    def step_fn(carry, tokens):
        mem_buf, mem_ent_buf, mem_len = carry
        emb = jnp.take(params["embed"], tokens, axis=0)                   # (S, E)

        # kv = concat(mem_x, x) written into the fixed-capacity buffer (rows >= kv_len masked)
        kv_buf = jax.lax.dynamic_update_slice(mem_buf, emb, (mem_len, 0))
        kv_len = mem_len + SEQ_LEN

        logits, ent = _memory_layer_pallas(emb, kv_buf, kv_len, params)   # (S,V), (S,)

        # mem_x_new = concat(mem_x, x.detach()[0]) == kv_buf (same contents)
        new_ent_buf = jax.lax.dynamic_update_slice(mem_ent_buf, ent, (mem_len,))
        new_len = kv_len

        comp_buf, comp_ent, comp_len = _compress_memory(kv_buf, new_ent_buf, new_len)
        do_comp = new_len > MEM_SIZE_BASE
        mem_buf_out = jnp.where(do_comp, comp_buf, kv_buf)
        mem_ent_out = jnp.where(do_comp, comp_ent, new_ent_buf)
        mem_len_out = jnp.where(do_comp, comp_len, new_len).astype(jnp.int32)

        ent_eff = jnp.sum(mem_ent_out) / mem_len_out.astype(jnp.float32)  # device scalar
        ys = (logits, ent, mem_buf_out, mem_ent_out, mem_len_out, ent_eff)
        return (mem_buf_out, mem_ent_out, mem_len_out), ys

    carry, ys = jax.lax.scan(step_fn, (mem_buf, mem_ent_buf, mem_len), tokens_all)
    return carry, ys


# =====================================================================
# Pure-JAX / numpy f32 reference of the same math (validation only).
# =====================================================================
def _reference_layer(x_emb, kv, p):
    S, L = x_emb.shape[0], kv.shape[0]
    q = x_emb @ p["wq"] + p["bq"]
    k = kv @ p["wk"] + p["bk"]
    v = kv @ p["wv"] + p["bv"]
    qh = q.reshape(S, NUM_HEADS, HEAD_DIM).transpose(1, 0, 2)
    kh = k.reshape(L, NUM_HEADS, HEAD_DIM).transpose(1, 0, 2)
    vh = v.reshape(L, NUM_HEADS, HEAD_DIM).transpose(1, 0, 2)
    scores = jnp.einsum("hqd,hkd->hqk", qh, kh) / math.sqrt(HEAD_DIM)
    pw = jax.nn.softmax(scores, axis=-1)
    attn = jnp.einsum("hqk,hkd->hqd", pw, vh).transpose(1, 0, 2).reshape(S, EMBED_DIM)
    attn = attn @ p["wo"] + p["bo"]
    aw = pw.mean(axis=0)
    ent = -(aw * jnp.log(aw + ENT_EPS)).sum(-1)

    def ln(z, w, b):
        mu = z.mean(-1, keepdims=True)
        var = ((z - mu) ** 2).mean(-1, keepdims=True)
        return (z - mu) / jnp.sqrt(var + LN_EPS) * w + b

    x2 = ln(x_emb + attn, p["ln1_w"], p["ln1_b"])
    ff = jnp.maximum(x2 @ p["w1"] + p["b1"], 0.0) @ p["w2"] + p["b2"]
    out = ln(x2 + ff, p["ln2_w"], p["ln2_b"])
    logits = out @ p["w_out"] + p["b_out"]
    return logits, ent


def _reference_memory_update(mem_x, mem_ent, x_det, ent):
    """Dynamic-shape (torch-style) memory update, driven by the given entropies."""
    if mem_x is None:
        mem_x_new, mem_ent_new = x_det, ent
    else:
        mem_x_new = np.concatenate([mem_x, x_det], axis=0)
        mem_ent_new = np.concatenate([mem_ent, ent], axis=0)
    if mem_x_new.shape[0] > MEM_SIZE_BASE:
        thresh = mem_ent_new.mean() * THRESHOLD_FACTOR
        idx = np.nonzero(mem_ent_new >= thresh)[0]
        if idx.size > MEM_SIZE_BASE:
            idx = np.argsort(-mem_ent_new, kind="stable")[:MEM_SIZE_BASE]
        mem_x_new = mem_x_new[idx]
        mem_ent_new = mem_ent_new[idx]
    ent_eff = float(mem_ent_new.sum()) / mem_ent_new.shape[0]
    return mem_x_new, mem_ent_new, ent_eff


# =====================================================================
# Deterministic parameter init (reference f32 layout + kernel bf16 layout).
# =====================================================================
def init_params(key):
    ks = jax.random.split(key, 16)

    def wmat(k, shape, scale=0.1):
        w = scale * jax.random.normal(k, shape, dtype=jnp.float32)
        return w.astype(jnp.bfloat16).astype(jnp.float32)   # bf16-representable values

    def bvec(k, n, scale=0.05):
        return scale * jax.random.normal(k, (1, n), dtype=jnp.float32)

    ref = {
        "embed": jax.random.normal(ks[0], (VOCAB_SIZE, EMBED_DIM), dtype=jnp.float32),
        "wq": wmat(ks[1], (EMBED_DIM, EMBED_DIM)),
        "wk": wmat(ks[2], (EMBED_DIM, EMBED_DIM)),
        "wv": wmat(ks[3], (EMBED_DIM, EMBED_DIM)),
        "wo": wmat(ks[4], (EMBED_DIM, EMBED_DIM)),
        "bq": bvec(ks[5], EMBED_DIM),
        "bk": bvec(ks[6], EMBED_DIM),
        "bv": bvec(ks[7], EMBED_DIM),
        "bo": bvec(ks[8], EMBED_DIM),
        "ln1_w": jnp.ones((1, EMBED_DIM), jnp.float32),
        "ln1_b": jnp.zeros((1, EMBED_DIM), jnp.float32),
        "w1": wmat(ks[9], (EMBED_DIM, FF_DIM)),
        "b1": bvec(ks[10], FF_DIM),
        "w2": wmat(ks[11], (FF_DIM, EMBED_DIM)),
        "b2": bvec(ks[12], EMBED_DIM),
        "ln2_w": jnp.ones((1, EMBED_DIM), jnp.float32),
        "ln2_b": jnp.zeros((1, EMBED_DIM), jnp.float32),
        "w_out": wmat(ks[13], (EMBED_DIM, VOCAB_SIZE)),
        "b_out": bvec(ks[14], VOCAB_SIZE),
    }
    kern = {
        "embed": ref["embed"],
        # 1/sqrt(HEAD_DIM) folded into the query projection (weight AND bias)
        "wq": (ref["wq"] * ATTN_SCALE).astype(jnp.bfloat16),
        "bq": ref["bq"] * ATTN_SCALE,
        "wk": ref["wk"].astype(jnp.bfloat16), "bk": ref["bk"],
        "wv": ref["wv"].astype(jnp.bfloat16), "bv": ref["bv"],
        "wo": ref["wo"].astype(jnp.bfloat16), "bo": ref["bo"],
        "ln1_w": ref["ln1_w"], "ln1_b": ref["ln1_b"],
        "w1": ref["w1"].astype(jnp.bfloat16), "b1": ref["b1"],
        "w2": ref["w2"].astype(jnp.bfloat16), "b2": ref["b2"],
        "ln2_w": ref["ln2_w"], "ln2_b": ref["ln2_b"],
        "w_out": ref["w_out"].astype(jnp.bfloat16), "b_out": ref["b_out"],
    }
    return ref, kern


if __name__ == "__main__":
    key = jax.random.PRNGKey(0)
    pkey, dkey = jax.random.split(key)
    p_ref, p_kern = init_params(pkey)

    # fixed-shape state (single compile for the whole multi-step run)
    mem_buf = jnp.zeros((MEM_CAP, EMBED_DIM), jnp.float32)
    mem_ent_buf = jnp.zeros((MEM_CAP,), jnp.float32)
    mem_len = jnp.zeros((), jnp.int32)

    n_steps = 8
    tokens_all = jax.random.randint(dkey, (n_steps, SEQ_LEN), 0, VOCAB_SIZE,
                                    dtype=jnp.int32)

    # one dispatch for all steps (lax.scan inside a single jit)
    _, ys = transformer_xl_run(p_kern, tokens_all, mem_buf, mem_ent_buf, mem_len)
    (logits_all, ent_all, mem_buf_all, mem_ent_all, mem_len_all, ent_eff_all) = \
        jax.block_until_ready(ys)

    assert logits_all.shape == (n_steps, SEQ_LEN, VOCAB_SIZE)

    # ---- validate every step against the pure-JAX / numpy f32 reference ----
    # bf16 matmul operands + approx reciprocal => ~1% level deviation from the f32 reference.
    embed_np = np.asarray(p_ref["embed"])
    tokens_np = np.asarray(tokens_all)
    ref_mem_x = None
    ref_mem_ent = None

    for step in range(n_steps):
        emb_np = embed_np[tokens_np[step]]                                # (S, E)
        kv_np = emb_np if ref_mem_x is None else np.concatenate([ref_mem_x, emb_np], 0)
        ref_logits, ref_ent = _reference_layer(jnp.asarray(emb_np), jnp.asarray(kv_np),
                                               p_ref)

        np.testing.assert_allclose(np.asarray(logits_all[step]), np.asarray(ref_logits),
                                   rtol=3e-2, atol=3e-2)
        np.testing.assert_allclose(np.asarray(ent_all[step]), np.asarray(ref_ent),
                                   rtol=3e-2, atol=3e-2)

        # drive the reference (dynamic-shape) memory update with the kernel entropies so
        # the static-shape compression path can be checked deterministically.
        ent_np = np.asarray(ent_all[step])
        ref_mem_x, ref_mem_ent, ref_eff = _reference_memory_update(
            ref_mem_x, ref_mem_ent, emb_np, ent_np)

        ml = int(mem_len_all[step])
        assert ml == ref_mem_x.shape[0]
        assert ml <= MEM_CAP
        np.testing.assert_allclose(np.asarray(mem_buf_all[step])[:ml], ref_mem_x,
                                   rtol=0, atol=1e-6)
        np.testing.assert_allclose(np.asarray(mem_ent_all[step])[:ml], ref_mem_ent,
                                   rtol=0, atol=1e-6)
        assert abs(float(ent_eff_all[step]) - ref_eff) < 1e-3
        assert np.isfinite(float(ent_eff_all[step]))

    print("KERNEL_OK")
</pallas_src>

<mosaic_0001>
module attributes {stable_mosaic.version = 11 : i64} {
  func.func @_memory_layer_kernel(%arg0: memref<1xi32, #tpu.memory_space<smem>>, %arg1: memref<8x128xf32, #tpu.memory_space<vmem>>, %arg2: memref<48x128xf32, #tpu.memory_space<vmem>>, %arg3: memref<128x128xbf16, #tpu.memory_space<vmem>>, %arg4: memref<128x128xbf16, #tpu.memory_space<vmem>>, %arg5: memref<128x128xbf16, #tpu.memory_space<vmem>>, %arg6: memref<1x128xf32, #tpu.memory_space<vmem>>, %arg7: memref<1x128xf32, #tpu.memory_space<vmem>>, %arg8: memref<1x128xf32, #tpu.memory_space<vmem>>, %arg9: memref<128x128xbf16, #tpu.memory_space<vmem>>, %arg10: memref<1x128xf32, #tpu.memory_space<vmem>>, %arg11: memref<1x128xf32, #tpu.memory_space<vmem>>, %arg12: memref<1x128xf32, #tpu.memory_space<vmem>>, %arg13: memref<128x512xbf16, #tpu.memory_space<vmem>>, %arg14: memref<1x512xf32, #tpu.memory_space<vmem>>, %arg15: memref<512x128xbf16, #tpu.memory_space<vmem>>, %arg16: memref<1x128xf32, #tpu.memory_space<vmem>>, %arg17: memref<1x128xf32, #tpu.memory_space<vmem>>, %arg18: memref<1x128xf32, #tpu.memory_space<vmem>>, %arg19: memref<128x256xbf16, #tpu.memory_space<vmem>>, %arg20: memref<1x256xf32, #tpu.memory_space<vmem>>, %arg21: memref<8x256xf32, #tpu.memory_space<vmem>>, %arg22: memref<8x128xf32, #tpu.memory_space<vmem>>) attributes {dimension_semantics = [], scalar_prefetch = 0 : i64, scratch_operands = 0 : i64, tpu.core_type = #tpu.core_type<tc>} {
    %c0 = arith.constant 0 : index
    %c0_0 = arith.constant 0 : index
    %0 = vector.load %arg1[%c0, %c0_0] : memref<8x128xf32, #tpu.memory_space<vmem>>, vector<8x128xf32>
    %c0_1 = arith.constant 0 : index
    %1 = memref.load %arg0[%c0_1] : memref<1xi32, #tpu.memory_space<smem>>
    %2 = arith.truncf %0 : vector<8x128xf32> to vector<8x128xbf16>
    %c0_2 = arith.constant 0 : index
    %c0_3 = arith.constant 0 : index
    %3 = vector.load %arg2[%c0_2, %c0_3] : memref<48x128xf32, #tpu.memory_space<vmem>>, vector<48x128xf32>
    %4 = arith.truncf %3 : vector<48x128xf32> to vector<48x128xbf16>
    %c0_4 = arith.constant 0 : index
    %c0_5 = arith.constant 0 : index
    %5 = vector.load %arg3[%c0_4, %c0_5] : memref<128x128xbf16, #tpu.memory_space<vmem>>, vector<128x128xbf16>
    %cst = arith.constant dense<0.000000e+00> : vector<8x128xf32>
    %6 = tpu.matmul %2, %5, %cst {dimension_numbers = #tpu.dot_dimension_numbers<[1], [0], [0], [1], [0, 0, 1, 1], [], []>} : vector<8x128xbf16>, vector<128x128xbf16>, vector<8x128xf32> -> vector<8x128xf32>
    %c0_6 = arith.constant 0 : index
    %c0_7 = arith.constant 0 : index
    %7 = vector.load %arg6[%c0_6, %c0_7] : memref<1x128xf32, #tpu.memory_space<vmem>>, vector<1x128xf32>
    %8 = vector.broadcast %7 : vector<1x128xf32> to vector<8x128xf32>
    %9 = arith.addf %6, %8 : vector<8x128xf32>
    %c0_8 = arith.constant 0 : index
    %c0_9 = arith.constant 0 : index
    %10 = vector.load %arg4[%c0_8, %c0_9] : memref<128x128xbf16, #tpu.memory_space<vmem>>, vector<128x128xbf16>
    %cst_10 = arith.constant dense<0.000000e+00> : vector<48x128xf32>
    %11 = tpu.matmul %4, %10, %cst_10 {dimension_numbers = #tpu.dot_dimension_numbers<[1], [0], [0], [1], [0, 0, 1, 1], [], []>} : vector<48x128xbf16>, vector<128x128xbf16>, vector<48x128xf32> -> vector<48x128xf32>
    %c0_11 = arith.constant 0 : index
    %c0_12 = arith.constant 0 : index
    %12 = vector.load %arg7[%c0_11, %c0_12] : memref<1x128xf32, #tpu.memory_space<vmem>>, vector<1x128xf32>
    %13 = vector.broadcast %12 : vector<1x128xf32> to vector<48x128xf32>
    %14 = arith.addf %11, %13 : vector<48x128xf32>
    %c0_13 = arith.constant 0 : index
    %c0_14 = arith.constant 0 : index
    %15 = vector.load %arg5[%c0_13, %c0_14] : memref<128x128xbf16, #tpu.memory_space<vmem>>, vector<128x128xbf16>
    %cst_15 = arith.constant dense<0.000000e+00> : vector<48x128xf32>
    %16 = tpu.matmul %4, %15, %cst_15 {dimension_numbers = #tpu.dot_dimension_numbers<[1], [0], [0], [1], [0, 0, 1, 1], [], []>} : vector<48x128xbf16>, vector<128x128xbf16>, vector<48x128xf32> -> vector<48x128xf32>
    %c0_16 = arith.constant 0 : index
    %c0_17 = arith.constant 0 : index
    %17 = vector.load %arg8[%c0_16, %c0_17] : memref<1x128xf32, #tpu.memory_space<vmem>>, vector<1x128xf32>
    %18 = vector.broadcast %17 : vector<1x128xf32> to vector<48x128xf32>
    %19 = arith.addf %16, %18 : vector<48x128xf32>
    %20 = tpu.iota {dimensions = array<i32: 1>} : vector<8x48xi32>
    %21 = vector.broadcast %1 : i32 to vector<8x48xi32>
    %22 = arith.cmpi slt, %20, %21 : vector<8x48xi32>
    %cst_18 = arith.constant 0.000000e+00 : f32
    %23 = vector.broadcast %cst_18 : f32 to vector<8x48xf32>
    %24 = vector.extract_strided_slice %9 {offsets = [0, 0], sizes = [8, 32], strides = [1, 1]} : vector<8x128xf32> to vector<8x32xf32>
    %25 = vector.extract_strided_slice %14 {offsets = [0, 0], sizes = [48, 32], strides = [1, 1]} : vector<48x128xf32> to vector<48x32xf32>
    %26 = vector.extract_strided_slice %19 {offsets = [0, 0], sizes = [48, 32], strides = [1, 1]} : vector<48x128xf32> to vector<48x32xf32>
    %cst_19 = arith.constant dense<0.000000e+00> : vector<8x48xf32>
    %27 = tpu.matmul %24, %25, %cst_19 {dimension_numbers = #tpu.dot_dimension_numbers<[1], [1], [0], [0], [0, 0, 1, 0], [], []>} : vector<8x32xf32>, vector<48x32xf32>, vector<8x48xf32> -> vector<8x48xf32>
    %cst_20 = arith.constant -1.000000e+30 : f32
    %28 = vector.broadcast %cst_20 : f32 to vector<8x48xf32>
    %29 = arith.select %22, %27, %28 : vector<8x48xi1>, vector<8x48xf32>
    %cst_21 = arith.constant dense<0xFF800000> : vector<8xf32>
    %30 = vector.multi_reduction <maximumf>, %29, %cst_21 [1] : vector<8x48xf32> to vector<8xf32>
    %31 = vector.shape_cast %30 : vector<8xf32> to vector<8x1xf32>
    %32 = vector.broadcast %31 : vector<8x1xf32> to vector<8x48xf32>
    %33 = arith.subf %29, %32 : vector<8x48xf32>
    %34 = math.exp %33 : vector<8x48xf32>
    %cst_22 = arith.constant dense<0.000000e+00> : vector<8xf32>
    %35 = vector.multi_reduction <add>, %34, %cst_22 [1] : vector<8x48xf32> to vector<8xf32>
    %36 = vector.shape_cast %35 : vector<8xf32> to vector<8x1xf32>
    %37 = tpu.reciprocal %36 {approx = true} : vector<8x1xf32> -> vector<8x1xf32>
    %38 = vector.broadcast %37 : vector<8x1xf32> to vector<8x48xf32>
    %39 = arith.mulf %34, %38 : vector<8x48xf32>
    %40 = arith.addf %23, %39 : vector<8x48xf32>
    %cst_23 = arith.constant dense<0.000000e+00> : vector<8x32xf32>
    %41 = tpu.matmul %39, %26, %cst_23 {dimension_numbers = #tpu.dot_dimension_numbers<[1], [0], [0], [1], [0, 0, 1, 1], [], []>} : vector<8x48xf32>, vector<48x32xf32>, vector<8x32xf32> -> vector<8x32xf32>
    %42 = vector.extract_strided_slice %9 {offsets = [0, 32], sizes = [8, 32], strides = [1, 1]} : vector<8x128xf32> to vector<8x32xf32>
    %43 = vector.extract_strided_slice %14 {offsets = [0, 32], sizes = [48, 32], strides = [1, 1]} : vector<48x128xf32> to vector<48x32xf32>
    %44 = vector.extract_strided_slice %19 {offsets = [0, 32], sizes = [48, 32], strides = [1, 1]} : vector<48x128xf32> to vector<48x32xf32>
    %cst_24 = arith.constant dense<0.000000e+00> : vector<8x48xf32>
    %45 = tpu.matmul %42, %43, %cst_24 {dimension_numbers = #tpu.dot_dimension_numbers<[1], [1], [0], [0], [0, 0, 1, 0], [], []>} : vector<8x32xf32>, vector<48x32xf32>, vector<8x48xf32> -> vector<8x48xf32>
    %cst_25 = arith.constant -1.000000e+30 : f32
    %46 = vector.broadcast %cst_25 : f32 to vector<8x48xf32>
    %47 = arith.select %22, %45, %46 : vector<8x48xi1>, vector<8x48xf32>
    %cst_26 = arith.constant dense<0xFF800000> : vector<8xf32>
    %48 = vector.multi_reduction <maximumf>, %47, %cst_26 [1] : vector<8x48xf32> to vector<8xf32>
    %49 = vector.shape_cast %48 : vector<8xf32> to vector<8x1xf32>
    %50 = vector.broadcast %49 : vector<8x1xf32> to vector<8x48xf32>
    %51 = arith.subf %47, %50 : vector<8x48xf32>
    %52 = math.exp %51 : vector<8x48xf32>
    %cst_27 = arith.constant dense<0.000000e+00> : vector<8xf32>
    %53 = vector.multi_reduction <add>, %52, %cst_27 [1] : vector<8x48xf32> to vector<8xf32>
    %54 = vector.shape_cast %53 : vector<8xf32> to vector<8x1xf32>
    %55 = tpu.reciprocal %54 {approx = true} : vector<8x1xf32> -> vector<8x1xf32>
    %56 = vector.broadcast %55 : vector<8x1xf32> to vector<8x48xf32>
    %57 = arith.mulf %52, %56 : vector<8x48xf32>
    %58 = arith.addf %40, %57 : vector<8x48xf32>
    %cst_28 = arith.constant dense<0.000000e+00> : vector<8x32xf32>
    %59 = tpu.matmul %57, %44, %cst_28 {dimension_numbers = #tpu.dot_dimension_numbers<[1], [0], [0], [1], [0, 0, 1, 1], [], []>} : vector<8x48xf32>, vector<48x32xf32>, vector<8x32xf32> -> vector<8x32xf32>
    %60 = vector.extract_strided_slice %9 {offsets = [0, 64], sizes = [8, 32], strides = [1, 1]} : vector<8x128xf32> to vector<8x32xf32>
    %61 = vector.extract_strided_slice %14 {offsets = [0, 64], sizes = [48, 32], strides = [1, 1]} : vector<48x128xf32> to vector<48x32xf32>
    %62 = vector.extract_strided_slice %19 {offsets = [0, 64], sizes = [48, 32], strides = [1, 1]} : vector<48x128xf32> to vector<48x32xf32>
    %cst_29 = arith.constant dense<0.000000e+00> : vector<8x48xf32>
    %63 = tpu.matmul %60, %61, %cst_29 {dimension_numbers = #tpu.dot_dimension_numbers<[1], [1], [0], [0], [0, 0, 1, 0], [], []>} : vector<8x32xf32>, vector<48x32xf32>, vector<8x48xf32> -> vector<8x48xf32>
    %cst_30 = arith.constant -1.000000e+30 : f32
    %64 = vector.broadcast %cst_30 : f32 to vector<8x48xf32>
    %65 = arith.select %22, %63, %64 : vector<8x48xi1>, vector<8x48xf32>
    %cst_31 = arith.constant dense<0xFF800000> : vector<8xf32>
    %66 = vector.multi_reduction <maximumf>, %65, %cst_31 [1] : vector<8x48xf32> to vector<8xf32>
    %67 = vector.shape_cast %66 : vector<8xf32> to vector<8x1xf32>
    %68 = vector.broadcast %67 : vector<8x1xf32> to vector<8x48xf32>
    %69 = arith.subf %65, %68 : vector<8x48xf32>
    %70 = math.exp %69 : vector<8x48xf32>
    %cst_32 = arith.constant dense<0.000000e+00> : vector<8xf32>
    %71 = vector.multi_reduction <add>, %70, %cst_32 [1] : vector<8x48xf32> to vector<8xf32>
    %72 = vector.shape_cast %71 : vector<8xf32> to vector<8x1xf32>
    %73 = tpu.reciprocal %72 {approx = true} : vector<8x1xf32> -> vector<8x1xf32>
    %74 = vector.broadcast %73 : vector<8x1xf32> to vector<8x48xf32>
    %75 = arith.mulf %70, %74 : vector<8x48xf32>
    %76 = arith.addf %58, %75 : vector<8x48xf32>
    %cst_33 = arith.constant dense<0.000000e+00> : vector<8x32xf32>
    %77 = tpu.matmul %75, %62, %cst_33 {dimension_numbers = #tpu.dot_dimension_numbers<[1], [0], [0], [1], [0, 0, 1, 1], [], []>} : vector<8x48xf32>, vector<48x32xf32>, vector<8x32xf32> -> vector<8x32xf32>
    %78 = vector.extract_strided_slice %9 {offsets = [0, 96], sizes = [8, 32], strides = [1, 1]} : vector<8x128xf32> to vector<8x32xf32>
    %79 = vector.extract_strided_slice %14 {offsets = [0, 96], sizes = [48, 32], strides = [1, 1]} : vector<48x128xf32> to vector<48x32xf32>
    %80 = vector.extract_strided_slice %19 {offsets = [0, 96], sizes = [48, 32], strides = [1, 1]} : vector<48x128xf32> to vector<48x32xf32>
    %cst_34 = arith.constant dense<0.000000e+00> : vector<8x48xf32>
    %81 = tpu.matmul %78, %79, %cst_34 {dimension_numbers = #tpu.dot_dimension_numbers<[1], [1], [0], [0], [0, 0, 1, 0], [], []>} : vector<8x32xf32>, vector<48x32xf32>, vector<8x48xf32> -> vector<8x48xf32>
    %cst_35 = arith.constant -1.000000e+30 : f32
    %82 = vector.broadcast %cst_35 : f32 to vector<8x48xf32>
    %83 = arith.select %22, %81, %82 : vector<8x48xi1>, vector<8x48xf32>
    %cst_36 = arith.constant dense<0xFF800000> : vector<8xf32>
    %84 = vector.multi_reduction <maximumf>, %83, %cst_36 [1] : vector<8x48xf32> to vector<8xf32>
    %85 = vector.shape_cast %84 : vector<8xf32> to vector<8x1xf32>
    %86 = vector.broadcast %85 : vector<8x1xf32> to vector<8x48xf32>
    %87 = arith.subf %83, %86 : vector<8x48xf32>
    %88 = math.exp %87 : vector<8x48xf32>
    %cst_37 = arith.constant dense<0.000000e+00> : vector<8xf32>
    %89 = vector.multi_reduction <add>, %88, %cst_37 [1] : vector<8x48xf32> to vector<8xf32>
    %90 = vector.shape_cast %89 : vector<8xf32> to vector<8x1xf32>
    %91 = tpu.reciprocal %90 {approx = true} : vector<8x1xf32> -> vector<8x1xf32>
    %92 = vector.broadcast %91 : vector<8x1xf32> to vector<8x48xf32>
    %93 = arith.mulf %88, %92 : vector<8x48xf32>
    %94 = arith.addf %76, %93 : vector<8x48xf32>
    %cst_38 = arith.constant dense<0.000000e+00> : vector<8x32xf32>
    %95 = tpu.matmul %93, %80, %cst_38 {dimension_numbers = #tpu.dot_dimension_numbers<[1], [0], [0], [1], [0, 0, 1, 1], [], []>} : vector<8x48xf32>, vector<48x32xf32>, vector<8x32xf32> -> vector<8x32xf32>
    %96 = tpu.concatenate %41, %59, %77, %95 in 1 : vector<8x32xf32>, vector<8x32xf32>, vector<8x32xf32>, vector<8x32xf32> -> vector<8x128xf32>
    %97 = arith.truncf %96 : vector<8x128xf32> to vector<8x128xbf16>
    %c0_39 = arith.constant 0 : index
    %c0_40 = arith.constant 0 : index
    %98 = vector.load %arg9[%c0_39, %c0_40] : memref<128x128xbf16, #tpu.memory_space<vmem>>, vector<128x128xbf16>
    %cst_41 = arith.constant dense<0.000000e+00> : vector<8x128xf32>
    %99 = tpu.matmul %97, %98, %cst_41 {dimension_numbers = #tpu.dot_dimension_numbers<[1], [0], [0], [1], [0, 0, 1, 1], [], []>} : vector<8x128xbf16>, vector<128x128xbf16>, vector<8x128xf32> -> vector<8x128xf32>
    %c0_42 = arith.constant 0 : index
    %c0_43 = arith.constant 0 : index
    %100 = vector.load %arg10[%c0_42, %c0_43] : memref<1x128xf32, #tpu.memory_space<vmem>>, vector<1x128xf32>
    %101 = vector.broadcast %100 : vector<1x128xf32> to vector<8x128xf32>
    %102 = arith.addf %99, %101 : vector<8x128xf32>
    %cst_44 = arith.constant 2.500000e-01 : f32
    %103 = vector.broadcast %cst_44 : f32 to vector<8x48xf32>
    %104 = arith.mulf %94, %103 : vector<8x48xf32>
    %cst_45 = arith.constant 9.99999993E-9 : f32
    %105 = vector.broadcast %cst_45 : f32 to vector<8x48xf32>
    %106 = arith.addf %104, %105 : vector<8x48xf32>
    %107 = math.log %106 : vector<8x48xf32>
    %108 = arith.mulf %104, %107 : vector<8x48xf32>
    %cst_46 = arith.constant dense<0.000000e+00> : vector<8xf32>
    %109 = vector.multi_reduction <add>, %108, %cst_46 [1] : vector<8x48xf32> to vector<8xf32>
    %110 = vector.shape_cast %109 : vector<8xf32> to vector<8x1xf32>
    %cst_47 = arith.constant 0.000000e+00 : f32
    %111 = vector.broadcast %cst_47 : f32 to vector<8x1xf32>
    %112 = arith.subf %111, %110 : vector<8x1xf32>
    %113 = vector.shape_cast %112 : vector<8x1xf32> to vector<8x1xf32>
    %114 = vector.broadcast %113 : vector<8x1xf32> to vector<8x128xf32>
    %c0_48 = arith.constant 0 : index
    %c0_49 = arith.constant 0 : index
    %115 = vector.load %arg22[%c0_48, %c0_49] : memref<8x128xf32, #tpu.memory_space<vmem>>, vector<8x128xf32>
    tpu.vector_store %arg22[%c0_48, %c0_49], %114 {strides = array<i32>} : memref<8x128xf32, #tpu.memory_space<vmem>>, vector<8x128xf32>,
    %116 = arith.addf %0, %102 : vector<8x128xf32>
    %c0_50 = arith.constant 0 : index
    %c0_51 = arith.constant 0 : index
    %117 = vector.load %arg11[%c0_50, %c0_51] : memref<1x128xf32, #tpu.memory_space<vmem>>, vector<1x128xf32>
    %c0_52 = arith.constant 0 : index
    %c0_53 = arith.constant 0 : index
    %118 = vector.load %arg12[%c0_52, %c0_53] : memref<1x128xf32, #tpu.memory_space<vmem>>, vector<1x128xf32>
    %cst_54 = arith.constant dense<0.000000e+00> : vector<8xf32>
    %119 = vector.multi_reduction <add>, %116, %cst_54 [1] : vector<8x128xf32> to vector<8xf32>
    %120 = vector.shape_cast %119 : vector<8xf32> to vector<8x1xf32>
    %cst_55 = arith.constant 1.280000e+02 : f32
    %121 = vector.broadcast %cst_55 : f32 to vector<8x1xf32>
    %122 = arith.divf %120, %121 : vector<8x1xf32>
    %123 = vector.broadcast %122 : vector<8x1xf32> to vector<8x128xf32>
    %124 = arith.subf %116, %123 : vector<8x128xf32>
    %125 = vector.broadcast %122 : vector<8x1xf32> to vector<8x128xf32>
    %126 = arith.subf %116, %125 : vector<8x128xf32>
    %127 = arith.mulf %124, %126 : vector<8x128xf32>
    %cst_56 = arith.constant dense<0.000000e+00> : vector<8xf32>
    %128 = vector.multi_reduction <add>, %127, %cst_56 [1] : vector<8x128xf32> to vector<8xf32>
    %129 = vector.shape_cast %128 : vector<8xf32> to vector<8x1xf32>
    %cst_57 = arith.constant 1.280000e+02 : f32
    %130 = vector.broadcast %cst_57 : f32 to vector<8x1xf32>
    %131 = arith.divf %129, %130 : vector<8x1xf32>
    %132 = vector.broadcast %122 : vector<8x1xf32> to vector<8x128xf32>
    %133 = arith.subf %116, %132 : vector<8x128xf32>
    %cst_58 = arith.constant 9.99999974E-6 : f32
    %134 = vector.broadcast %cst_58 : f32 to vector<8x1xf32>
    %135 = arith.addf %131, %134 : vector<8x1xf32>
    %136 = math.rsqrt %135 : vector<8x1xf32>
    %137 = vector.broadcast %136 : vector<8x1xf32> to vector<8x128xf32>
    %138 = arith.mulf %133, %137 : vector<8x128xf32>
    %139 = vector.broadcast %117 : vector<1x128xf32> to vector<8x128xf32>
    %140 = arith.mulf %138, %139 : vector<8x128xf32>
    %141 = vector.broadcast %118 : vector<1x128xf32> to vector<8x128xf32>
    %142 = arith.addf %140, %141 : vector<8x128xf32>
    %143 = arith.truncf %142 : vector<8x128xf32> to vector<8x128xbf16>
    %c0_59 = arith.constant 0 : index
    %c0_60 = arith.constant 0 : index
    %144 = vector.load %arg13[%c0_59, %c0_60] : memref<128x512xbf16, #tpu.memory_space<vmem>>, vector<128x512xbf16>
    %cst_61 = arith.constant dense<0.000000e+00> : vector<8x512xf32>
    %145 = tpu.matmul %143, %144, %cst_61 {dimension_numbers = #tpu.dot_dimension_numbers<[1], [0], [0], [1], [0, 0, 1, 1], [], []>} : vector<8x128xbf16>, vector<128x512xbf16>, vector<8x512xf32> -> vector<8x512xf32>
    %c0_62 = arith.constant 0 : index
    %c0_63 = arith.constant 0 : index
    %146 = vector.load %arg14[%c0_62, %c0_63] : memref<1x512xf32, #tpu.memory_space<vmem>>, vector<1x512xf32>
    %147 = vector.broadcast %146 : vector<1x512xf32> to vector<8x512xf32>
    %148 = arith.addf %145, %147 : vector<8x512xf32>
    %cst_64 = arith.constant 0.000000e+00 : f32
    %149 = vector.broadcast %cst_64 : f32 to vector<8x512xf32>
    %150 = arith.maximumf %148, %149 : vector<8x512xf32>
    %151 = arith.truncf %150 : vector<8x512xf32> to vector<8x512xbf16>
    %c0_65 = arith.constant 0 : index
    %c0_66 = arith.constant 0 : index
    %152 = vector.load %arg15[%c0_65, %c0_66] : memref<512x128xbf16, #tpu.memory_space<vmem>>, vector<512x128xbf16>
    %cst_67 = arith.constant dense<0.000000e+00> : vector<8x128xf32>
    %153 = tpu.matmul %151, %152, %cst_67 {dimension_numbers = #tpu.dot_dimension_numbers<[1], [0], [0], [1], [0, 0, 1, 1], [], []>} : vector<8x512xbf16>, vector<512x128xbf16>, vector<8x128xf32> -> vector<8x128xf32>
    %c0_68 = arith.constant 0 : index
    %c0_69 = arith.constant 0 : index
    %154 = vector.load %arg16[%c0_68, %c0_69] : memref<1x128xf32, #tpu.memory_space<vmem>>, vector<1x128xf32>
    %155 = vector.broadcast %154 : vector<1x128xf32> to vector<8x128xf32>
    %156 = arith.addf %153, %155 : vector<8x128xf32>
    %157 = arith.addf %142, %156 : vector<8x128xf32>
    %c0_70 = arith.constant 0 : index
    %c0_71 = arith.constant 0 : index
    %158 = vector.load %arg17[%c0_70, %c0_71] : memref<1x128xf32, #tpu.memory_space<vmem>>, vector<1x128xf32>
    %c0_72 = arith.constant 0 : index
    %c0_73 = arith.constant 0 : index
    %159 = vector.load %arg18[%c0_72, %c0_73] : memref<1x128xf32, #tpu.memory_space<vmem>>, vector<1x128xf32>
    %cst_74 = arith.constant dense<0.000000e+00> : vector<8xf32>
    %160 = vector.multi_reduction <add>, %157, %cst_74 [1] : vector<8x128xf32> to vector<8xf32>
    %161 = vector.shape_cast %160 : vector<8xf32> to vector<8x1xf32>
    %cst_75 = arith.constant 1.280000e+02 : f32
    %162 = vector.broadcast %cst_75 : f32 to vector<8x1xf32>
    %163 = arith.divf %161, %162 : vector<8x1xf32>
    %164 = vector.broadcast %163 : vector<8x1xf32> to vector<8x128xf32>
    %165 = arith.subf %157, %164 : vector<8x128xf32>
    %166 = vector.broadcast %163 : vector<8x1xf32> to vector<8x128xf32>
    %167 = arith.subf %157, %166 : vector<8x128xf32>
    %168 = arith.mulf %165, %167 : vector<8x128xf32>
    %cst_76 = arith.constant dense<0.000000e+00> : vector<8xf32>
    %169 = vector.multi_reduction <add>, %168, %cst_76 [1] : vector<8x128xf32> to vector<8xf32>
    %170 = vector.shape_cast %169 : vector<8xf32> to vector<8x1xf32>
    %cst_77 = arith.constant 1.280000e+02 : f32
    %171 = vector.broadcast %cst_77 : f32 to vector<8x1xf32>
    %172 = arith.divf %170, %171 : vector<8x1xf32>
    %173 = vector.broadcast %163 : vector<8x1xf32> to vector<8x128xf32>
    %174 = arith.subf %157, %173 : vector<8x128xf32>
    %cst_78 = arith.constant 9.99999974E-6 : f32
    %175 = vector.broadcast %cst_78 : f32 to vector<8x1xf32>
    %176 = arith.addf %172, %175 : vector<8x1xf32>
    %177 = math.rsqrt %176 : vector<8x1xf32>
    %178 = vector.broadcast %177 : vector<8x1xf32> to vector<8x128xf32>
    %179 = arith.mulf %174, %178 : vector<8x128xf32>
    %180 = vector.broadcast %158 : vector<1x128xf32> to vector<8x128xf32>
    %181 = arith.mulf %179, %180 : vector<8x128xf32>
    %182 = vector.broadcast %159 : vector<1x128xf32> to vector<8x128xf32>
    %183 = arith.addf %181, %182 : vector<8x128xf32>
    %184 = arith.truncf %183 : vector<8x128xf32> to vector<8x128xbf16>
    %c0_79 = arith.constant 0 : index
    %c0_80 = arith.constant 0 : index
    %185 = vector.load %arg19[%c0_79, %c0_80] : memref<128x256xbf16, #tpu.memory_space<vmem>>, vector<128x256xbf16>
    %cst_81 = arith.constant dense<0.000000e+00> : vector<8x256xf32>
    %186 = tpu.matmul %184, %185, %cst_81 {dimension_numbers = #tpu.dot_dimension_numbers<[1], [0], [0], [1], [0, 0, 1, 1], [], []>} : vector<8x128xbf16>, vector<128x256xbf16>, vector<8x256xf32> -> vector<8x256xf32>
    %c0_82 = arith.constant 0 : index
    %c0_83 = arith.constant 0 : index
    %187 = vector.load %arg20[%c0_82, %c0_83] : memref<1x256xf32, #tpu.memory_space<vmem>>, vector<1x256xf32>
    %188 = vector.broadcast %187 : vector<1x256xf32> to vector<8x256xf32>
    %189 = arith.addf %186, %188 : vector<8x256xf32>
    %c0_84 = arith.constant 0 : index
    %c0_85 = arith.constant 0 : index
    %190 = vector.load %arg21[%c0_84, %c0_85] : memref<8x256xf32, #tpu.memory_space<vmem>>, vector<8x256xf32>
    tpu.vector_store %arg21[%c0_84, %c0_85], %189 {strides = array<i32>} : memref<8x256xf32, #tpu.memory_space<vmem>>, vector<8x256xf32>,
    return
  }
}

</mosaic_0001>

<llo_original>
// kernel: custom-call.11
$region0: #{custom-call.11}
  %s0 = inlined_call_operand.vmem [shape: f32[8], index: 0, kind: output, shape index: {}]

// kernel: custom-call.7
$region0: #{custom-call.7}
  %s0 = inlined_call_operand.hbm [shape: f32[8,8], index: 0, kind: output, shape index: {}]

// kernel: custom-call.10
$region0: #{custom-call.10}
  %s0 = inlined_call_operand.vmem [shape: s32[8], index: 0, kind: output, shape index: {}]

// kernel: custom-call.9
$region0: #{custom-call.9}
  %s0 = inlined_call_operand.hbm [shape: f32[8,48], index: 0, kind: output, shape index: {}]

// kernel: custom-call.6
$region0: #{custom-call.6}
  %s0 = inlined_call_operand.hbm [shape: f32[8,8,256], index: 0, kind: output, shape index: {}]

// kernel: custom-call.8
$region0: #{custom-call.8}
  %s0 = inlined_call_operand.hbm [shape: f32[8,48,128], index: 0, kind: output, shape index: {}]

// kernel: closed_call.4
$region0: #{closed_call.4}
  #allocation0 [shape = 'u32[]', space=smem, size = 0x4, offset = 0x4, fixed_abs, tag = 'smem constant byte address 0x4 - core index']
  #allocation1 [shape = 'u32[144,128]{1,0:T(1,128)}', space=vmem, size = 0x12000, scoped, tag = 'internal scratch']
  #allocation2 [shape = 's32[1]{0:T(128)S(6)}', space=smem, size = 0x200, scoped, tag = 'scoped memory for closed_call.4']
  %s0 = inlined_call_operand.hbm [shape: f32[8,8,256], index: 0, kind: input, shape index: {}, may-alias: {0,23}]
  %s1 = inlined_call_operand.<no memory space> [shape: s32[], index: 1, kind: input, shape index: {}]
  %s2 = inlined_call_operand.<no memory space> [shape: s32[1], index: 2, kind: input, shape index: {}]
  %s3 = inlined_call_operand.vmem [shape: f32[8,128], index: 3, kind: input, shape index: {}]
  %s4 = inlined_call_operand.vmem [shape: f32[48,128], index: 4, kind: input, shape index: {}]
  %s5 = inlined_call_operand.vmem [shape: bf16[128,128], index: 5, kind: input, shape index: {}]
  %s6 = inlined_call_operand.hbm [shape: bf16[128,128], index: 6, kind: input, shape index: {}]
  %s7 = inlined_call_operand.hbm [shape: bf16[128,128], index: 7, kind: input, shape index: {}]
  %s8 = inlined_call_operand.vmem [shape: f32[1,128], index: 8, kind: input, shape index: {}]
  %s9 = inlined_call_operand.vmem [shape: f32[1,128], index: 9, kind: input, shape index: {}]
  %s10 = inlined_call_operand.vmem [shape: f32[1,128], index: 10, kind: input, shape index: {}]
  %s11 = inlined_call_operand.hbm [shape: bf16[128,128], index: 11, kind: input, shape index: {}]
  %s12 = inlined_call_operand.vmem [shape: f32[1,128], index: 12, kind: input, shape index: {}]
  %s13 = inlined_call_operand.vmem [shape: f32[1,128], index: 13, kind: input, shape index: {}]
  %s14 = inlined_call_operand.vmem [shape: f32[1,128], index: 14, kind: input, shape index: {}]
  %s15 = inlined_call_operand.vmem [shape: bf16[128,512], index: 15, kind: input, shape index: {}]
  %s16 = inlined_call_operand.vmem [shape: f32[1,512], index: 16, kind: input, shape index: {}]
  %s17 = inlined_call_operand.hbm [shape: bf16[512,128], index: 17, kind: input, shape index: {}]
  %s18 = inlined_call_operand.vmem [shape: f32[1,128], index: 18, kind: input, shape index: {}]
  %s19 = inlined_call_operand.vmem [shape: f32[1,128], index: 19, kind: input, shape index: {}]
  %s20 = inlined_call_operand.vmem [shape: f32[1,128], index: 20, kind: input, shape index: {}]
  %s21 = inlined_call_operand.hbm [shape: bf16[128,256], index: 21, kind: input, shape index: {}]
  %s22 = inlined_call_operand.vmem [shape: f32[1,256], index: 22, kind: input, shape index: {}]
  %s23 = inlined_call_operand.hbm [shape: f32[8,8,256], index: 23, kind: output, shape index: {0}, may-alias: {0,23}]
  %s24 = inlined_call_operand.vmem [shape: f32[8,128], index: 24, kind: output, shape index: {1}]
  %25 = xla_tuple %s23, %s24
  %s26 = smul.addr %s1, 2
  %s27 = smul.addr %s26, 128
  %s28 = scalar_lea.hbm %s23, %s27
  %s29 = sld [smem:[#allocation0]]
  $region122: #{closed_call.4} parent=0
    _
  %s31 = ssub.s32 1, %s29
  %s32 = scalar_select 0, %s31, %s29
  %33 = sst [smem:[#allocation2]] %s2
  $region1: #{closed_call.4} parent=0
    #allocation3 [shape = 'u8[32768]{0}', space=vmem, size = 0x8000, scoped, tag = 'input window, operand 4, single buffered']
    #allocation4 [shape = 's32[1]{0}', space=sflag, size = 0x4, scoped, tag = 'scoped memory for closed_call.4']
    #allocation5 [shape = 's32[1]{0}', space=sflag, size = 0x4, scoped, tag = 'scoped memory for closed_call.4']
    #allocation6 [shape = 'u8[32768]{0}', space=vmem, size = 0x8000, scoped, tag = 'input window, operand 5, single buffered']
    #allocation7 [shape = 's32[1]{0}', space=sflag, size = 0x4, scoped, tag = 'scoped memory for closed_call.4']
    #allocation8 [shape = 'u8[32768]{0}', space=vmem, size = 0x8000, scoped, tag = 'input window, operand 9, single buffered']
    #allocation9 [shape = 'u8[131072]{0}', space=vmem, size = 0x20000, scoped, tag = 'input window, operand 15, single buffered']
    #allocation10 [shape = 's32[1]{0}', space=sflag, size = 0x4, scoped, tag = 'scoped memory for closed_call.4']
    #allocation11 [shape = 'u8[65536]{0}', space=vmem, size = 0x10000, scoped, tag = 'input window, operand 19, single buffered']
    #allocation12 [shape = 'u8[8192]{0}', space=vmem, size = 0x2000, scoped, tag = 'output window, operand 0, single buffered']
    %34 = vsyncpa [#allocation4], 0
    %35 = vsyncpa [#allocation7], 0
    %36 = vsyncpa [#allocation10], 0
    %37 = vsyncpa [#allocation5], 0
    // Predicated region
    $region2: #{closed_call.4} parent=1 // pred_check
      _
    $region3: #{closed_call.4} parent=1 // pred_check_branch
      %39 = sbr.rel (0) target = $region5
    $region4: #{closed_call.4} parent=1 // pred_region
      _
    $region5: #{closed_call.4} parent=1 // pred_fallthru
      _
    // Predicated region
    $region6: #{closed_call.4} parent=1 // pred_check
      _
    $region7: #{closed_call.4} parent=1 // pred_check_branch
      %41 = sbr.rel (0) target = $region9
    $region8: #{closed_call.4} parent=1 // pred_region
      _
    $region9: #{closed_call.4} parent=1 // pred_fallthru
      _
    // Predicated region
    $region10: #{closed_call.4} parent=1 // pred_check
      _
    $region11: #{closed_call.4} parent=1 // pred_check_branch
      %43 = sbr.rel (0) target = $region13
    $region12: #{closed_call.4} parent=1 // pred_region
      _
    $region13: #{closed_call.4} parent=1 // pred_fallthru
      _
    // Predicated region
    $region14: #{closed_call.4} parent=1 // pred_check
      _
    $region15: #{closed_call.4} parent=1 // pred_check_branch
      %45 = sbr.rel (0) target = $region17
    $region16: #{closed_call.4} parent=1 // pred_region
      _
    $region17: #{closed_call.4} parent=1 // pred_fallthru
      _
    // Predicated region
    $region18: #{closed_call.4} parent=1 // pred_check
      _
    $region19: #{closed_call.4} parent=1 // pred_check_branch
      %47 = sbr.rel (0) target = $region21
    $region20: #{closed_call.4} parent=1 // pred_region
      %s49 = ssub.s32 1024, 1024
      %50 = vsyncadd [#allocation4], %s49
      %s51 = sshll.u32 [#allocation3], 4
      %s52 = int_to_ptr.vmem [resolvable:$true] %s51
      %57 = dma.hbm_to_vmem [thread:$0]  %s6, 1024, %s52, [#allocation4], 64, 64, 4
    $region21: #{closed_call.4} parent=1 // pred_fallthru
      _
    // Predicated region
    $region22: #{closed_call.4} parent=1 // pred_check
      _
    $region23: #{closed_call.4} parent=1 // pred_check_branch
      %59 = sbr.rel (0) target = $region25
    $region24: #{closed_call.4} parent=1 // pred_region
      %s61 = ssub.s32 1024, 1024
      %62 = vsyncadd [#allocation7], %s61
      %s63 = sshll.u32 [#allocation6], 4
      %s64 = int_to_ptr.vmem [resolvable:$true] %s63
      %69 = dma.hbm_to_vmem [thread:$0]  %s7, 1024, %s64, [#allocation7], 64, 64, 4
    $region25: #{closed_call.4} parent=1 // pred_fallthru
      _
    // Predicated region
    $region26: #{closed_call.4} parent=1 // pred_check
      _
    $region27: #{closed_call.4} parent=1 // pred_check_branch
      %71 = sbr.rel (0) target = $region29
    $region28: #{closed_call.4} parent=1 // pred_region
      _
    $region29: #{closed_call.4} parent=1 // pred_fallthru
      _
    // Predicated region
    $region30: #{closed_call.4} parent=1 // pred_check
      _
    $region31: #{closed_call.4} parent=1 // pred_check_branch
      %73 = sbr.rel (0) target = $region33
    $region32: #{closed_call.4} parent=1 // pred_region
      _
    $region33: #{closed_call.4} parent=1 // pred_fallthru
      _
    // Predicated region
    $region34: #{closed_call.4} parent=1 // pred_check
      _
    $region35: #{closed_call.4} parent=1 // pred_check_branch
      %75 = sbr.rel (0) target = $region37
    $region36: #{closed_call.4} parent=1 // pred_region
      _
    $region37: #{closed_call.4} parent=1 // pred_fallthru
      _
    // Predicated region
    $region38: #{closed_call.4} parent=1 // pred_check
      _
    $region39: #{closed_call.4} parent=1 // pred_check_branch
      %77 = sbr.rel (0) target = $region41
    $region40: #{closed_call.4} parent=1 // pred_region
      %s79 = ssub.s32 1024, 1024
      %80 = vsyncadd [#allocation7], %s79
      %s81 = sshll.u32 [#allocation8], 4
      %s82 = int_to_ptr.vmem [resolvable:$true] %s81
      %87 = dma.hbm_to_vmem [thread:$0]  %s11, 1024, %s82, [#allocation7], 64, 64, 4
    $region41: #{closed_call.4} parent=1 // pred_fallthru
      _
    // Predicated region
    $region42: #{closed_call.4} parent=1 // pred_check
      _
    $region43: #{closed_call.4} parent=1 // pred_check_branch
      %89 = sbr.rel (0) target = $region45
    $region44: #{closed_call.4} parent=1 // pred_region
      _
    $region45: #{closed_call.4} parent=1 // pred_fallthru
      _
    // Predicated region
    $region46: #{closed_call.4} parent=1 // pred_check
      _
    $region47: #{closed_call.4} parent=1 // pred_check_branch
      %91 = sbr.rel (0) target = $region49
    $region48: #{closed_call.4} parent=1 // pred_region
      _
    $region49: #{closed_call.4} parent=1 // pred_fallthru
      _
    // Predicated region
    $region50: #{closed_call.4} parent=1 // pred_check
      _
    $region51: #{closed_call.4} parent=1 // pred_check_branch
      %93 = sbr.rel (0) target = $region53
    $region52: #{closed_call.4} parent=1 // pred_region
      _
    $region53: #{closed_call.4} parent=1 // pred_fallthru
      _
    // Predicated region
    $region54: #{closed_call.4} parent=1 // pred_check
      _
    $region55: #{closed_call.4} parent=1 // pred_check_branch
      %95 = sbr.rel (0) target = $region57
    $region56: #{closed_call.4} parent=1 // pred_region
      _
    $region57: #{closed_call.4} parent=1 // pred_fallthru
      _
    // Predicated region
    $region58: #{closed_call.4} parent=1 // pred_check
      _
    $region59: #{closed_call.4} parent=1 // pred_check_branch
      %97 = sbr.rel (0) target = $region61
    $region60: #{closed_call.4} parent=1 // pred_region
      _
    $region61: #{closed_call.4} parent=1 // pred_fallthru
      _
    // Predicated region
    $region62: #{closed_call.4} parent=1 // pred_check
      _
    $region63: #{closed_call.4} parent=1 // pred_check_branch
      %99 = sbr.rel (0) target = $region65
    $region64: #{closed_call.4} parent=1 // pred_region
      %s101 = ssub.s32 4096, 4096
      %102 = vsyncadd [#allocation10], %s101
      %s103 = sshll.u32 [#allocation9], 4
      %s104 = int_to_ptr.vmem [resolvable:$true] %s103
      %109 = dma.hbm_to_vmem [thread:$0]  %s17, 4096, %s104, [#allocation10], 64, 64, 4
    $region65: #{closed_call.4} parent=1 // pred_fallthru
      _
    // Predicated region
    $region66: #{closed_call.4} parent=1 // pred_check
      _
    $region67: #{closed_call.4} parent=1 // pred_check_branch
      %111 = sbr.rel (0) target = $region69
    $region68: #{closed_call.4} parent=1 // pred_region
      _
    $region69: #{closed_call.4} parent=1 // pred_fallthru
      _
    // Predicated region
    $region70: #{closed_call.4} parent=1 // pred_check
      _
    $region71: #{closed_call.4} parent=1 // pred_check_branch
      %113 = sbr.rel (0) target = $region73
    $region72: #{closed_call.4} parent=1 // pred_region
      _
    $region73: #{closed_call.4} parent=1 // pred_fallthru
      _
    // Predicated region
    $region74: #{closed_call.4} parent=1 // pred_check
      _
    $region75: #{closed_call.4} parent=1 // pred_check_branch
      %115 = sbr.rel (0) target = $region77
    $region76: #{closed_call.4} parent=1 // pred_region
      _
    $region77: #{closed_call.4} parent=1 // pred_fallthru
      _
    // Predicated region
    $region78: #{closed_call.4} parent=1 // pred_check
      _
    $region79: #{closed_call.4} parent=1 // pred_check_branch
      %117 = sbr.rel (0) target = $region81
    $region80: #{closed_call.4} parent=1 // pred_region
      %s119 = ssub.s32 2048, 2048
      %120 = vsyncadd [#allocation10], %s119
      %s121 = sshll.u32 [#allocation11], 4
      %s122 = int_to_ptr.vmem [resolvable:$true] %s121
      %127 = dma.hbm_to_vmem [thread:$0]  %s21, 2048, %s122, [#allocation10], 128, 128, 8
    $region81: #{closed_call.4} parent=1 // pred_fallthru
      _
    // Predicated region
    $region82: #{closed_call.4} parent=1 // pred_check
      _
    $region83: #{closed_call.4} parent=1 // pred_check_branch
      %129 = sbr.rel (0) target = $region85
    $region84: #{closed_call.4} parent=1 // pred_region
      _
    $region85: #{closed_call.4} parent=1 // pred_fallthru
      _
    // Predicated region
    $region86: #{closed_call.4} parent=1 // pred_check
      _
    $region87: #{closed_call.4} parent=1 // pred_check_branch
      %131 = sbr.rel (0) target = $region89
    $region88: #{closed_call.4} parent=1 // pred_region
      %132 = dma.done [#allocation4], 1024
    $region89: #{closed_call.4} parent=1 // pred_fallthru
      _
    // Predicated region
    $region90: #{closed_call.4} parent=1 // pred_check
      _
    $region91: #{closed_call.4} parent=1 // pred_check_branch
      %134 = sbr.rel (0) target = $region93
    $region92: #{closed_call.4} parent=1 // pred_region
      %135 = dma.done [#allocation7], 1024
    $region93: #{closed_call.4} parent=1 // pred_fallthru
      _
    // Predicated region
    $region94: #{closed_call.4} parent=1 // pred_check
      _
    $region95: #{closed_call.4} parent=1 // pred_check_branch
      %137 = sbr.rel (0) target = $region97
    $region96: #{closed_call.4} parent=1 // pred_region
      %138 = dma.done [#allocation7], 1024
    $region97: #{closed_call.4} parent=1 // pred_fallthru
      _
    // Predicated region
    $region98: #{closed_call.4} parent=1 // pred_check
      _
    $region99: #{closed_call.4} parent=1 // pred_check_branch
      %140 = sbr.rel (0) target = $region101
    $region100: #{closed_call.4} parent=1 // pred_region
      %141 = dma.done [#allocation10], 4096
    $region101: #{closed_call.4} parent=1 // pred_fallthru
      _
    // Predicated region
    $region102: #{closed_call.4} parent=1 // pred_check
      _
    $region103: #{closed_call.4} parent=1 // pred_check_branch
      %143 = sbr.rel (0) target = $region105
    $region104: #{closed_call.4} parent=1 // pred_region
      %144 = dma.done [#allocation10], 2048
    $region105: #{closed_call.4} parent=1 // pred_fallthru
      _
    %v146 = vld [vmem:[%s3] sm:$0xff]
    %s147 = sld [smem:[#allocation2]]
    %v148 = vpack.c.bf16 %v146, %v146
    %v149 = vld [vmem:[%s4] sm:$0xff]
    %v150 = vld [vmem:[%s4 + $0x8] sm:$0xff]
    %v151 = vld [vmem:[%s4 + $0x10] sm:$0xff]
    %v152 = vld [vmem:[%s4 + $0x18] sm:$0xff]
    %v153 = vld [vmem:[%s4 + $0x20] sm:$0xff]
    %v154 = vld [vmem:[%s4 + $0x28] sm:$0xff]
    %v155 = vpack.c.bf16 %v150, %v149
    %v156 = vpack.c.bf16 %v152, %v151
    %v157 = vpack.c.bf16 %v154, %v153
    %v158 = vld [vmem:[%s5] sm:$0xf]
    %v159 = vld [vmem:[%s5 + $0x4] sm:$0xf]
    %v160 = vld [vmem:[%s5 + $0x8] sm:$0xf]
    %v161 = vld [vmem:[%s5 + $0xc] sm:$0xf]
    %v162 = vld [vmem:[%s5 + $0x10] sm:$0xf]
    %v163 = vld [vmem:[%s5 + $0x14] sm:$0xf]
    %v164 = vld [vmem:[%s5 + $0x18] sm:$0xf]
    %v165 = vld [vmem:[%s5 + $0x1c] sm:$0xf]
    %v166 = vld [vmem:[%s5 + $0x20] sm:$0xf]
    %v167 = vld [vmem:[%s5 + $0x24] sm:$0xf]
    %v168 = vld [vmem:[%s5 + $0x28] sm:$0xf]
    %v169 = vld [vmem:[%s5 + $0x2c] sm:$0xf]
    %v170 = vld [vmem:[%s5 + $0x30] sm:$0xf]
    %v171 = vld [vmem:[%s5 + $0x34] sm:$0xf]
    %v172 = vld [vmem:[%s5 + $0x38] sm:$0xf]
    %v173 = vld [vmem:[%s5 + $0x3c] sm:$0xf]
    %v174 = vld [vmem:[%s8] sm:$0x1]
    %v176 = vlaneseq
    %v177 = vshrl.u32 %v176, 7
    %v178 = vsub.s32 0, %v177
    %v179 = vrot.slane %v174, %v178
    %v197 = vunpack.c.l.b16 %v158
    %v198 = vunpack.c.l.b16 %v159
    %v199 = vunpack.c.l.b16 %v160
    %v200 = vunpack.c.l.b16 %v161
    %v201 = vunpack.c.l.b16 %v162
    %v202 = vunpack.c.l.b16 %v163
    %v203 = vunpack.c.l.b16 %v164
    %v204 = vunpack.c.l.b16 %v165
    %v205 = vunpack.c.l.b16 %v166
    %v206 = vunpack.c.l.b16 %v167
    %v207 = vunpack.c.l.b16 %v168
    %v208 = vunpack.c.l.b16 %v169
    %v209 = vunpack.c.l.b16 %v170
    %v210 = vunpack.c.l.b16 %v171
    %v211 = vunpack.c.l.b16 %v172
    %v212 = vunpack.c.l.b16 %v173
    %v213 = vpack.c.b16 %v198, %v197
    %v214 = vpack.c.b16 %v200, %v199
    %v215 = vpack.c.b16 %v202, %v201
    %v216 = vpack.c.b16 %v204, %v203
    %v217 = vpack.c.b16 %v206, %v205
    %v218 = vpack.c.b16 %v208, %v207
    %v219 = vpack.c.b16 %v210, %v209
    %v220 = vpack.c.b16 %v212, %v211
    %229 = vmatprep.subr.bf16.mxu0 0
    %230 = vmatpush1.bf16.msra.mxu0 %v213
    %231 = vmatprep.subr.bf16.mxu0 0
    %232 = vmatpush1.bf16.msra.mxu0 %v214
    %233 = vmatprep.subr.bf16.mxu0 0
    %234 = vmatpush1.bf16.msra.mxu0 %v215
    %235 = vmatprep.subr.bf16.mxu0 0
    %236 = vmatpush1.bf16.msra.mxu0 %v216
    %237 = vmatprep.subr.bf16.mxu0 0
    %238 = vmatpush1.bf16.msra.mxu0 %v217
    %239 = vmatprep.subr.bf16.mxu0 0
    %240 = vmatpush1.bf16.msra.mxu0 %v218
    %241 = vmatprep.subr.bf16.mxu0 0
    %242 = vmatpush1.bf16.msra.mxu0 %v219
    %243 = vmatprep.subr.bf16.mxu0 0
    %244 = vmatpush1.bf16.msra.mxu0 %v220
    %245 = vmatprep.subr.bf16.mxu0 0
    %246 = vmatpush1.bf16.msra.mxu0 0
    %247 = vmatprep.subr.bf16.mxu0 0
    %248 = vmatpush1.bf16.msra.mxu0 0
    %249 = vmatprep.subr.bf16.mxu0 0
    %250 = vmatpush1.bf16.msra.mxu0 0
    %251 = vmatprep.subr.bf16.mxu0 0
    %252 = vmatpush1.bf16.msra.mxu0 0
    %253 = vmatprep.subr.bf16.mxu0 0
    %254 = vmatpush1.bf16.msra.mxu0 0
    %255 = vmatprep.subr.bf16.mxu0 0
    %256 = vmatpush1.bf16.msra.mxu0 0
    %257 = vmatprep.subr.bf16.mxu0 0
    %258 = vmatpush1.bf16.msra.mxu0 0
    %259 = vmatprep.subr.bf16.mxu0 0
    %260 = vmatpush1.bf16.msra.mxu0 0
    %261 = vmatprep.mubr.bf16.mxu0 0
    %262 = vmatmul.mubr.bf16.gmra.mrb[0].mxu0 %v148
    %v263 = vpop.f32.mrb[0].mxu0
    %v264 = vadd.f32 %v179, %v263
    %v265 = vpop.f32.mrb[0].mxu0
    %v266 = vpop.f32.mrb[0].mxu0
    %v267 = vpop.f32.mrb[0].mxu0
    %268 = vdwg.mxu0
    %v269 = vld [vmem:[#allocation3] sm:$0xf]
    %v270 = vld [vmem:[#allocation3 + $0x4] sm:$0xf]
    %v271 = vld [vmem:[#allocation3 + $0x8] sm:$0xf]
    %v272 = vld [vmem:[#allocation3 + $0xc] sm:$0xf]
    %v273 = vld [vmem:[#allocation3 + $0x10] sm:$0xf]
    %v274 = vld [vmem:[#allocation3 + $0x14] sm:$0xf]
    %v275 = vld [vmem:[#allocation3 + $0x18] sm:$0xf]
    %v276 = vld [vmem:[#allocation3 + $0x1c] sm:$0xf]
    %v277 = vld [vmem:[#allocation3 + $0x20] sm:$0xf]
    %v278 = vld [vmem:[#allocation3 + $0x24] sm:$0xf]
    %v279 = vld [vmem:[#allocation3 + $0x28] sm:$0xf]
    %v280 = vld [vmem:[#allocation3 + $0x2c] sm:$0xf]
    %v281 = vld [vmem:[#allocation3 + $0x30] sm:$0xf]
    %v282 = vld [vmem:[#allocation3 + $0x34] sm:$0xf]
    %v283 = vld [vmem:[#allocation3 + $0x38] sm:$0xf]
    %v284 = vld [vmem:[#allocation3 + $0x3c] sm:$0xf]
    %v285 = vld [vmem:[%s9] sm:$0x1]
    %v287 = vlaneseq
    %v288 = vshrl.u32 %v287, 7
    %v289 = vsub.s32 0, %v288
    %v290 = vrot.slane %v285, %v289
    %v308 = vunpack.c.l.b16 %v269
    %v309 = vunpack.c.l.b16 %v270
    %v310 = vunpack.c.l.b16 %v271
    %v311 = vunpack.c.l.b16 %v272
    %v312 = vunpack.c.l.b16 %v273
    %v313 = vunpack.c.l.b16 %v274
    %v314 = vunpack.c.l.b16 %v275
    %v315 = vunpack.c.l.b16 %v276
    %v316 = vunpack.c.l.b16 %v277
    %v317 = vunpack.c.l.b16 %v278
    %v318 = vunpack.c.l.b16 %v279
    %v319 = vunpack.c.l.b16 %v280
    %v320 = vunpack.c.l.b16 %v281
    %v321 = vunpack.c.l.b16 %v282
    %v322 = vunpack.c.l.b16 %v283
    %v323 = vunpack.c.l.b16 %v284
    %v324 = vpack.c.b16 %v309, %v308
    %v325 = vpack.c.b16 %v311, %v310
    %v326 = vpack.c.b16 %v313, %v312
    %v327 = vpack.c.b16 %v315, %v314
    %v328 = vpack.c.b16 %v317, %v316
    %v329 = vpack.c.b16 %v319, %v318
    %v330 = vpack.c.b16 %v321, %v320
    %v331 = vpack.c.b16 %v323, %v322
    %340 = vmatprep.subr.bf16.mxu0 0
    %341 = vmatpush1.bf16.msra.mxu0 %v324
    %342 = vmatprep.subr.bf16.mxu0 0
    %343 = vmatpush1.bf16.msra.mxu0 %v325
    %344 = vmatprep.subr.bf16.mxu0 0
    %345 = vmatpush1.bf16.msra.mxu0 %v326
    %346 = vmatprep.subr.bf16.mxu0 0
    %347 = vmatpush1.bf16.msra.mxu0 %v327
    %348 = vmatprep.subr.bf16.mxu0 0
    %349 = vmatpush1.bf16.msra.mxu0 %v328
    %350 = vmatprep.subr.bf16.mxu0 0
    %351 = vmatpush1.bf16.msra.mxu0 %v329
    %352 = vmatprep.subr.bf16.mxu0 0
    %353 = vmatpush1.bf16.msra.mxu0 %v330
    %354 = vmatprep.subr.bf16.mxu0 0
    %355 = vmatpush1.bf16.msra.mxu0 %v331
    %356 = vmatprep.subr.bf16.mxu0 0
    %357 = vmatpush1.bf16.msra.mxu0 0
    %358 = vmatprep.subr.bf16.mxu0 0
    %359 = vmatpush1.bf16.msra.mxu0 0
    %360 = vmatprep.subr.bf16.mxu0 0
    %361 = vmatpush1.bf16.msra.mxu0 0
    %362 = vmatprep.subr.bf16.mxu0 0
    %363 = vmatpush1.bf16.msra.mxu0 0
    %364 = vmatprep.subr.bf16.mxu0 0
    %365 = vmatpush1.bf16.msra.mxu0 0
    %366 = vmatprep.subr.bf16.mxu0 0
    %367 = vmatpush1.bf16.msra.mxu0 0
    %368 = vmatprep.subr.bf16.mxu0 0
    %369 = vmatpush1.bf16.msra.mxu0 0
    %370 = vmatprep.subr.bf16.mxu0 0
    %371 = vmatpush1.bf16.msra.mxu0 0
    %372 = vmatprep.mubr.bf16.mxu0 0
    %373 = vmatmul.mubr.bf16.gmra.mrb[0].mxu0 %v155
    %v374 = vpop.f32.mrb[0].mxu0
    %v375 = vadd.f32 %v290, %v374
    %v376 = vpop.f32.mrb[0].mxu0
    %v377 = vpop.f32.mrb[0].mxu0
    %v378 = vadd.f32 %v290, %v377
    %v379 = vpop.f32.mrb[0].mxu0
    %380 = vmatprep.mubr.bf16.mxu0 0
    %381 = vmatmul.mubr.bf16.gmra.mrb[0].mxu0 %v156
    %v382 = vpop.f32.mrb[0].mxu0
    %v383 = vadd.f32 %v290, %v382
    %v384 = vpop.f32.mrb[0].mxu0
    %v385 = vpop.f32.mrb[0].mxu0
    %v386 = vadd.f32 %v290, %v385
    %v387 = vpop.f32.mrb[0].mxu0
    %388 = vmatprep.mubr.bf16.mxu0 0
    %389 = vmatmul.mubr.bf16.gmra.mrb[0].mxu0 %v157
    %v390 = vpop.f32.mrb[0].mxu0
    %v391 = vadd.f32 %v290, %v390
    %v392 = vpop.f32.mrb[0].mxu0
    %v393 = vpop.f32.mrb[0].mxu0
    %v394 = vadd.f32 %v290, %v393
    %v395 = vpop.f32.mrb[0].mxu0
    %396 = vdwg.mxu0
    %v397 = vld [vmem:[#allocation6] sm:$0xf]
    %v398 = vld [vmem:[#allocation6 + $0x4] sm:$0xf]
    %v399 = vld [vmem:[#allocation6 + $0x8] sm:$0xf]
    %v400 = vld [vmem:[#allocation6 + $0xc] sm:$0xf]
    %v401 = vld [vmem:[#allocation6 + $0x10] sm:$0xf]
    %v402 = vld [vmem:[#allocation6 + $0x14] sm:$0xf]
    %v403 = vld [vmem:[#allocation6 + $0x18] sm:$0xf]
    %v404 = vld [vmem:[#allocation6 + $0x1c] sm:$0xf]
    %v405 = vld [vmem:[#allocation6 + $0x20] sm:$0xf]
    %v406 = vld [vmem:[#allocation6 + $0x24] sm:$0xf]
    %v407 = vld [vmem:[#allocation6 + $0x28] sm:$0xf]
    %v408 = vld [vmem:[#allocation6 + $0x2c] sm:$0xf]
    %v409 = vld [vmem:[#allocation6 + $0x30] sm:$0xf]
    %v410 = vld [vmem:[#allocation6 + $0x34] sm:$0xf]
    %v411 = vld [vmem:[#allocation6 + $0x38] sm:$0xf]
    %v412 = vld [vmem:[#allocation6 + $0x3c] sm:$0xf]
    %v413 = vld [vmem:[%s10] sm:$0x1]
    %v415 = vlaneseq
    %v416 = vshrl.u32 %v415, 7
    %v417 = vsub.s32 0, %v416
    %v418 = vrot.slane %v413, %v417
    %v436 = vunpack.c.l.b16 %v397
    %v437 = vunpack.c.l.b16 %v398
    %v438 = vunpack.c.l.b16 %v399
    %v439 = vunpack.c.l.b16 %v400
    %v440 = vunpack.c.l.b16 %v401
    %v441 = vunpack.c.l.b16 %v402
    %v442 = vunpack.c.l.b16 %v403
    %v443 = vunpack.c.l.b16 %v404
    %v444 = vunpack.c.l.b16 %v405
    %v445 = vunpack.c.l.b16 %v406
    %v446 = vunpack.c.l.b16 %v407
    %v447 = vunpack.c.l.b16 %v408
    %v448 = vunpack.c.l.b16 %v409
    %v449 = vunpack.c.l.b16 %v410
    %v450 = vunpack.c.l.b16 %v411
    %v451 = vunpack.c.l.b16 %v412
    %v452 = vpack.c.b16 %v437, %v436
    %v453 = vpack.c.b16 %v439, %v438
    %v454 = vpack.c.b16 %v441, %v440
    %v455 = vpack.c.b16 %v443, %v442
    %v456 = vpack.c.b16 %v445, %v444
    %v457 = vpack.c.b16 %v447, %v446
    %v458 = vpack.c.b16 %v449, %v448
    %v459 = vpack.c.b16 %v451, %v450
    %468 = vmatprep.subr.bf16.mxu0 0
    %469 = vmatpush1.bf16.msra.mxu0 %v452
    %470 = vmatprep.subr.bf16.mxu0 0
    %471 = vmatpush1.bf16.msra.mxu0 %v453
    %472 = vmatprep.subr.bf16.mxu0 0
    %473 = vmatpush1.bf16.msra.mxu0 %v454
    %474 = vmatprep.subr.bf16.mxu0 0
    %475 = vmatpush1.bf16.msra.mxu0 %v455
    %476 = vmatprep.subr.bf16.mxu0 0
    %477 = vmatpush1.bf16.msra.mxu0 %v456
    %478 = vmatprep.subr.bf16.mxu0 0
    %479 = vmatpush1.bf16.msra.mxu0 %v457
    %480 = vmatprep.subr.bf16.mxu0 0
    %481 = vmatpush1.bf16.msra.mxu0 %v458
    %482 = vmatprep.subr.bf16.mxu0 0
    %483 = vmatpush1.bf16.msra.mxu0 %v459
    %484 = vmatprep.subr.bf16.mxu0 0
    %485 = vmatpush1.bf16.msra.mxu0 0
    %486 = vmatprep.subr.bf16.mxu0 0
    %487 = vmatpush1.bf16.msra.mxu0 0
    %488 = vmatprep.subr.bf16.mxu0 0
    %489 = vmatpush1.bf16.msra.mxu0 0
    %490 = vmatprep.subr.bf16.mxu0 0
    %491 = vmatpush1.bf16.msra.mxu0 0
    %492 = vmatprep.subr.bf16.mxu0 0
    %493 = vmatpush1.bf16.msra.mxu0 0
    %494 = vmatprep.subr.bf16.mxu0 0
    %495 = vmatpush1.bf16.msra.mxu0 0
    %496 = vmatprep.subr.bf16.mxu0 0
    %497 = vmatpush1.bf16.msra.mxu0 0
    %498 = vmatprep.subr.bf16.mxu0 0
    %499 = vmatpush1.bf16.msra.mxu0 0
    %500 = vmatprep.mubr.bf16.mxu0 0
    %501 = vmatmul.mubr.bf16.gmra.mrb[0].mxu0 %v155
    %v502 = vpop.f32.mrb[0].mxu0
    %v503 = vadd.f32 %v418, %v502
    %v504 = vpop.f32.mrb[0].mxu0
    %v505 = vpop.f32.mrb[0].mxu0
    %v506 = vadd.f32 %v418, %v505
    %v507 = vpop.f32.mrb[0].mxu0
    %508 = vmatprep.mubr.bf16.mxu0 0
    %509 = vmatmul.mubr.bf16.gmra.mrb[0].mxu0 %v156
    %v510 = vpop.f32.mrb[0].mxu0
    %v511 = vadd.f32 %v418, %v510
    %v512 = vpop.f32.mrb[0].mxu0
    %v513 = vpop.f32.mrb[0].mxu0
    %v514 = vadd.f32 %v418, %v513
    %v515 = vpop.f32.mrb[0].mxu0
    %516 = vmatprep.mubr.bf16.mxu0 0
    %517 = vmatmul.mubr.bf16.gmra.mrb[0].mxu0 %v157
    %v518 = vpop.f32.mrb[0].mxu0
    %v519 = vadd.f32 %v418, %v518
    %v520 = vpop.f32.mrb[0].mxu0
    %v521 = vpop.f32.mrb[0].mxu0
    %v522 = vadd.f32 %v418, %v521
    %v523 = vpop.f32.mrb[0].mxu0
    %524 = vdwg.mxu0
    %v525 = vlaneseq
    %v526 = vand.u32 %v525, 127
    %v527 = vstv %s147
    %vm528 = vcmp.lt.s32.totalorder %v526, %v527
    %vm529 = vcmask 261120
    %v531 = vsel %vm529, %v264, 0
    %v534 = vsel %vm529, %v375, 0
    %v537 = vsel %vm529, %v378, 0
    %v540 = vsel %vm529, %v383, 0
    %v543 = vsel %vm529, %v386, 0
    %v546 = vsel %vm529, %v391, 0
    %v549 = vsel %vm529, %v394, 0
    %551 = vmatprep.subr.mxu0 0.0
    %552 = vmatpush1.xpose.msra.mxu0 %v534
    %553 = vmatprep.subr.mxu0 0.0
    %554 = vmatpush1.xpose.msra.mxu0 %v537
    %555 = vmatprep.subr.mxu0 0.0
    %556 = vmatpush1.xpose.msra.mxu0 %v540
    %557 = vmatprep.subr.mxu0 0.0
    %558 = vmatpush1.xpose.msra.mxu0 %v543
    %559 = vmatprep.subr.mxu0 0.0
    %560 = vmatpush1.xpose.msra.mxu0 %v546
    %561 = vmatprep.subr.mxu0 0.0
    %562 = vmatpush1.xpose.msra.mxu0 %v549
    %563 = vmatprep.subr.mxu0 0.0
    %564 = vmatpush1.xpose.msra.mxu0 0.0
    %565 = vmatprep.subr.mxu0 0.0
    %566 = vmatpush1.xpose.msra.mxu0 0.0
    %567 = vmatprep.subr.mxu0 0.0
    %568 = vmatpush1.xpose.msra.mxu0 0.0
    %569 = vmatprep.subr.mxu0 0.0
    %570 = vmatpush1.xpose.msra.mxu0 0.0
    %571 = vmatprep.subr.mxu0 0.0
    %572 = vmatpush1.xpose.msra.mxu0 0.0
    %573 = vmatprep.subr.mxu0 0.0
    %574 = vmatpush1.xpose.msra.mxu0 0.0
    %575 = vmatprep.subr.mxu0 0.0
    %576 = vmatpush1.xpose.msra.mxu0 0.0
    %577 = vmatprep.subr.mxu0 0.0
    %578 = vmatpush1.xpose.msra.mxu0 0.0
    %579 = vmatprep.subr.mxu0 0.0
    %580 = vmatpush1.xpose.msra.mxu0 0.0
    %581 = vmatprep.subr.mxu0 0.0
    %582 = vmatpush1.xpose.msra.mxu0 0.0
    %583 = vmatprep.subr.mxu0 0.0
    %584 = vmatpush1.xpose.msra.mxu0 0.0
    %585 = vmatprep.subr.mxu0 0.0
    %586 = vmatpush1.xpose.msra.mxu0 0.0
    %587 = vmatprep.subr.mxu0 0.0
    %588 = vmatpush1.xpose.msra.mxu0 0.0
    %589 = vmatprep.subr.mxu0 0.0
    %590 = vmatpush1.xpose.msra.mxu0 0.0
    %591 = vmatprep.subr.mxu0 0.0
    %592 = vmatpush1.xpose.msra.mxu0 0.0
    %593 = vmatprep.subr.mxu0 0.0
    %594 = vmatpush1.xpose.msra.mxu0 0.0
    %595 = vmatprep.subr.mxu0 0.0
    %596 = vmatpush1.xpose.msra.mxu0 0.0
    %597 = vmatprep.subr.mxu0 0.0
    %598 = vmatpush1.xpose.msra.mxu0 0.0
    %599 = vmatprep.subr.mxu0 0.0
    %600 = vmatpush1.xpose.msra.mxu0 0.0
    %601 = vmatprep.subr.mxu0 0.0
    %602 = vmatpush1.xpose.msra.mxu0 0.0
    %603 = vmatprep.subr.mxu0 0.0
    %604 = vmatpush1.xpose.msra.mxu0 0.0
    %605 = vmatprep.subr.mxu0 0.0
    %606 = vmatpush1.xpose.msra.mxu0 0.0
    %607 = vmatprep.subr.mxu0 0.0
    %608 = vmatpush1.xpose.msra.mxu0 0.0
    %609 = vmatprep.subr.mxu0 0.0
    %610 = vmatpush1.xpose.msra.mxu0 0.0
    %611 = vmatprep.subr.mxu0 0.0
    %612 = vmatpush1.xpose.msra.mxu0 0.0
    %613 = vmatprep.subr.mxu0 0.0
    %614 = vmatpush1.xpose.msra.mxu0 0.0
    %615 = vmatprep.mubr.f32.mxu0 0.0
    %616 = vmatmul.mubr.f32.gmra.mrb[0].mxu0 %v531
    %v617 = vpop.f32.mrb[0].mxu0
    %v618 = vadd.f32 0.0, %v617
    %v619 = vpop.f32.mrb[0].mxu0
    %620 = vdwg.mxu0
    %v621 = vsel %vm528, %v618, -1e+30
    %vm622 = vcmask 392192
    %v623 = vsel %vm622, %v621, -inf
    %624 = vmax.xlane.f32.xlu0 %v623
    %v625 = vpop.xlane.xlu0 %624
    %v626 = vsub.f32 %v621, %v625
    %v627 = vmul.f32 %v626, 1.442695
    %v628 = vpow.pop %v627
    %v629 = vsel %vm622, %v628, 0.0
    %630 = vadd.xlane.f32.xlu0 %v629
    %v631 = vpop.xlane.xlu0 %630
    %v632 = vrcp.pop %v631
    %v633 = vmul.f32 %v628, %v632
    %v634 = vadd.f32 %v633, 0.0
    %v636 = vsel %vm622, %v633, 0
    %638 = vmatprep.subr.mxu0 0.0
    %639 = vmatpush1.msra.mxu0 %v503
    %640 = vmatprep.subr.mxu0 0.0
    %641 = vmatpush1.msra.mxu0 %v506
    %642 = vmatprep.subr.mxu0 0.0
    %643 = vmatpush1.msra.mxu0 %v511
    %644 = vmatprep.subr.mxu0 0.0
    %645 = vmatpush1.msra.mxu0 %v514
    %646 = vmatprep.subr.mxu0 0.0
    %647 = vmatpush1.msra.mxu0 %v519
    %648 = vmatprep.subr.mxu0 0.0
    %649 = vmatpush1.msra.mxu0 %v522
    %650 = vmatprep.subr.mxu0 0.0
    %651 = vmatpush1.msra.mxu0 0.0
    %652 = vmatprep.subr.mxu0 0.0
    %653 = vmatpush1.msra.mxu0 0.0
    %654 = vmatprep.subr.mxu0 0.0
    %655 = vmatpush1.msra.mxu0 0.0
    %656 = vmatprep.subr.mxu0 0.0
    %657 = vmatpush1.msra.mxu0 0.0
    %658 = vmatprep.subr.mxu0 0.0
    %659 = vmatpush1.msra.mxu0 0.0
    %660 = vmatprep.subr.mxu0 0.0
    %661 = vmatpush1.msra.mxu0 0.0
    %662 = vmatprep.subr.mxu0 0.0
    %663 = vmatpush1.msra.mxu0 0.0
    %664 = vmatprep.subr.mxu0 0.0
    %665 = vmatpush1.msra.mxu0 0.0
    %666 = vmatprep.subr.mxu0 0.0
    %667 = vmatpush1.msra.mxu0 0.0
    %668 = vmatprep.subr.mxu0 0.0
    %669 = vmatpush1.msra.mxu0 0.0
    %670 = vmatprep.subr.mxu0 0.0
    %671 = vmatpush1.msra.mxu0 0.0
    %672 = vmatprep.subr.mxu0 0.0
    %673 = vmatpush1.msra.mxu0 0.0
    %674 = vmatprep.subr.mxu0 0.0
    %675 = vmatpush1.msra.mxu0 0.0
    %676 = vmatprep.subr.mxu0 0.0
    %677 = vmatpush1.msra.mxu0 0.0
    %678 = vmatprep.subr.mxu0 0.0
    %679 = vmatpush1.msra.mxu0 0.0
    %680 = vmatprep.subr.mxu0 0.0
    %681 = vmatpush1.msra.mxu0 0.0
    %682 = vmatprep.subr.mxu0 0.0
    %683 = vmatpush1.msra.mxu0 0.0
    %684 = vmatprep.subr.mxu0 0.0
    %685 = vmatpush1.msra.mxu0 0.0
    %686 = vmatprep.subr.mxu0 0.0
    %687 = vmatpush1.msra.mxu0 0.0
    %688 = vmatprep.subr.mxu0 0.0
    %689 = vmatpush1.msra.mxu0 0.0
    %690 = vmatprep.subr.mxu0 0.0
    %691 = vmatpush1.msra.mxu0 0.0
    %692 = vmatprep.subr.mxu0 0.0
    %693 = vmatpush1.msra.mxu0 0.0
    %694 = vmatprep.subr.mxu0 0.0
    %695 = vmatpush1.msra.mxu0 0.0
    %696 = vmatprep.subr.mxu0 0.0
    %697 = vmatpush1.msra.mxu0 0.0
    %698 = vmatprep.subr.mxu0 0.0
    %699 = vmatpush1.msra.mxu0 0.0
    %700 = vmatprep.subr.mxu0 0.0
    %701 = vmatpush1.msra.mxu0 0.0
    %702 = vmatprep.mubr.f32.mxu0 0.0
    %703 = vmatmul.mubr.f32.gmra.mrb[0].mxu0 %v636
    %v704 = vpop.f32.mrb[0].mxu0
    %v705 = vadd.f32 0.0, %v704
    %v706 = vpop.f32.mrb[0].mxu0
    %707 = vdwg.mxu0
    %708 = vrot.lane.b32.xlu0 %v264, 96
    %v709 = vpop.permute.xlu0 %708
    %710 = vrot.lane.b32.xlu0 %v375, 96
    %v711 = vpop.permute.xlu0 %710
    %712 = vrot.lane.b32.xlu0 %v378, 96
    %v713 = vpop.permute.xlu0 %712
    %714 = vrot.lane.b32.xlu0 %v383, 96
    %v715 = vpop.permute.xlu0 %714
    %716 = vrot.lane.b32.xlu0 %v386, 96
    %v717 = vpop.permute.xlu0 %716
    %718 = vrot.lane.b32.xlu0 %v391, 96
    %v719 = vpop.permute.xlu0 %718
    %720 = vrot.lane.b32.xlu0 %v394, 96
    %v721 = vpop.permute.xlu0 %720
    %v722 = vsel %vm529, %v709, 0
    %v724 = vsel %vm529, %v711, 0
    %v726 = vsel %vm529, %v713, 0
    %v728 = vsel %vm529, %v715, 0
    %v730 = vsel %vm529, %v717, 0
    %v732 = vsel %vm529, %v719, 0
    %v734 = vsel %vm529, %v721, 0
    %736 = vmatprep.subr.mxu0 0.0
    %737 = vmatpush1.xpose.msra.mxu0 %v724
    %738 = vmatprep.subr.mxu0 0.0
    %739 = vmatpush1.xpose.msra.mxu0 %v726
    %740 = vmatprep.subr.mxu0 0.0
    %741 = vmatpush1.xpose.msra.mxu0 %v728
    %742 = vmatprep.subr.mxu0 0.0
    %743 = vmatpush1.xpose.msra.mxu0 %v730
    %744 = vmatprep.subr.mxu0 0.0
    %745 = vmatpush1.xpose.msra.mxu0 %v732
    %746 = vmatprep.subr.mxu0 0.0
    %747 = vmatpush1.xpose.msra.mxu0 %v734
    %748 = vmatprep.subr.mxu0 0.0
    %749 = vmatpush1.xpose.msra.mxu0 0.0
    %750 = vmatprep.subr.mxu0 0.0
    %751 = vmatpush1.xpose.msra.mxu0 0.0
    %752 = vmatprep.subr.mxu0 0.0
    %753 = vmatpush1.xpose.msra.mxu0 0.0
    %754 = vmatprep.subr.mxu0 0.0
    %755 = vmatpush1.xpose.msra.mxu0 0.0
    %756 = vmatprep.subr.mxu0 0.0
    %757 = vmatpush1.xpose.msra.mxu0 0.0
    %758 = vmatprep.subr.mxu0 0.0
    %759 = vmatpush1.xpose.msra.mxu0 0.0
    %760 = vmatprep.subr.mxu0 0.0
    %761 = vmatpush1.xpose.msra.mxu0 0.0
    %762 = vmatprep.subr.mxu0 0.0
    %763 = vmatpush1.xpose.msra.mxu0 0.0
    %764 = vmatprep.subr.mxu0 0.0
    %765 = vmatpush1.xpose.msra.mxu0 0.0
    %766 = vmatprep.subr.mxu0 0.0
    %767 = vmatpush1.xpose.msra.mxu0 0.0
    %768 = vmatprep.subr.mxu0 0.0
    %769 = vmatpush1.xpose.msra.mxu0 0.0
    %770 = vmatprep.subr.mxu0 0.0
    %771 = vmatpush1.xpose.msra.mxu0 0.0
    %772 = vmatprep.subr.mxu0 0.0
    %773 = vmatpush1.xpose.msra.mxu0 0.0
    %774 = vmatprep.subr.mxu0 0.0
    %775 = vmatpush1.xpose.msra.mxu0 0.0
    %776 = vmatprep.subr.mxu0 0.0
    %777 = vmatpush1.xpose.msra.mxu0 0.0
    %778 = vmatprep.subr.mxu0 0.0
    %779 = vmatpush1.xpose.msra.mxu0 0.0
    %780 = vmatprep.subr.mxu0 0.0
    %781 = vmatpush1.xpose.msra.mxu0 0.0
    %782 = vmatprep.subr.mxu0 0.0
    %783 = vmatpush1.xpose.msra.mxu0 0.0
    %784 = vmatprep.subr.mxu0 0.0
    %785 = vmatpush1.xpose.msra.mxu0 0.0
    %786 = vmatprep.subr.mxu0 0.0
    %787 = vmatpush1.xpose.msra.mxu0 0.0
    %788 = vmatprep.subr.mxu0 0.0
    %789 = vmatpush1.xpose.msra.mxu0 0.0
    %790 = vmatprep.subr.mxu0 0.0
    %791 = vmatpush1.xpose.msra.mxu0 0.0
    %792 = vmatprep.subr.mxu0 0.0
    %793 = vmatpush1.xpose.msra.mxu0 0.0
    %794 = vmatprep.subr.mxu0 0.0
    %795 = vmatpush1.xpose.msra.mxu0 0.0
    %796 = vmatprep.subr.mxu0 0.0
    %797 = vmatpush1.xpose.msra.mxu0 0.0
    %798 = vmatprep.subr.mxu0 0.0
    %799 = vmatpush1.xpose.msra.mxu0 0.0
    %800 = vmatprep.mubr.f32.mxu0 0.0
    %801 = vmatmul.mubr.f32.gmra.mrb[0].mxu0 %v722
    %v802 = vpop.f32.mrb[0].mxu0
    %v803 = vadd.f32 0.0, %v802
    %v804 = vpop.f32.mrb[0].mxu0
    %805 = vdwg.mxu0
    %v806 = vsel %vm528, %v803, -1e+30
    %v807 = vsel %vm622, %v806, -inf
    %808 = vmax.xlane.f32.xlu0 %v807
    %v809 = vpop.xlane.xlu0 %808
    %v810 = vsub.f32 %v806, %v809
    %v811 = vmul.f32 %v810, 1.442695
    %v812 = vpow.pop %v811
    %v813 = vsel %vm622, %v812, 0.0
    %814 = vadd.xlane.f32.xlu0 %v813
    %v815 = vpop.xlane.xlu0 %814
    %v816 = vrcp.pop %v815
    %v817 = vmul.f32 %v812, %v816
    %v818 = vadd.f32 %v634, %v817
    %825 = vrot.lane.b32.xlu0 %v503, 96
    %v826 = vpop.permute.xlu0 %825
    %827 = vrot.lane.b32.xlu0 %v506, 96
    %v828 = vpop.permute.xlu0 %827
    %829 = vrot.lane.b32.xlu0 %v511, 96
    %v830 = vpop.permute.xlu0 %829
    %831 = vrot.lane.b32.xlu0 %v514, 96
    %v832 = vpop.permute.xlu0 %831
    %833 = vrot.lane.b32.xlu0 %v519, 96
    %v834 = vpop.permute.xlu0 %833
    %835 = vrot.lane.b32.xlu0 %v522, 96
    %v836 = vpop.permute.xlu0 %835
    %v844 = vsel %vm622, %v817, 0
    %846 = vmatprep.subr.mxu0 0.0
    %847 = vmatpush1.msra.mxu0 %v826
    %848 = vmatprep.subr.mxu0 0.0
    %849 = vmatpush1.msra.mxu0 %v828
    %850 = vmatprep.subr.mxu0 0.0
    %851 = vmatpush1.msra.mxu0 %v830
    %852 = vmatprep.subr.mxu0 0.0
    %853 = vmatpush1.msra.mxu0 %v832
    %854 = vmatprep.subr.mxu0 0.0
    %855 = vmatpush1.msra.mxu0 %v834
    %856 = vmatprep.subr.mxu0 0.0
    %857 = vmatpush1.msra.mxu0 %v836
    %858 = vmatprep.subr.mxu0 0.0
    %859 = vmatpush1.msra.mxu0 0.0
    %860 = vmatprep.subr.mxu0 0.0
    %861 = vmatpush1.msra.mxu0 0.0
    %862 = vmatprep.subr.mxu0 0.0
    %863 = vmatpush1.msra.mxu0 0.0
    %864 = vmatprep.subr.mxu0 0.0
    %865 = vmatpush1.msra.mxu0 0.0
    %866 = vmatprep.subr.mxu0 0.0
    %867 = vmatpush1.msra.mxu0 0.0
    %868 = vmatprep.subr.mxu0 0.0
    %869 = vmatpush1.msra.mxu0 0.0
    %870 = vmatprep.subr.mxu0 0.0
    %871 = vmatpush1.msra.mxu0 0.0
    %872 = vmatprep.subr.mxu0 0.0
    %873 = vmatpush1.msra.mxu0 0.0
    %874 = vmatprep.subr.mxu0 0.0
    %875 = vmatpush1.msra.mxu0 0.0
    %876 = vmatprep.subr.mxu0 0.0
    %877 = vmatpush1.msra.mxu0 0.0
    %878 = vmatprep.subr.mxu0 0.0
    %879 = vmatpush1.msra.mxu0 0.0
    %880 = vmatprep.subr.mxu0 0.0
    %881 = vmatpush1.msra.mxu0 0.0
    %882 = vmatprep.subr.mxu0 0.0
    %883 = vmatpush1.msra.mxu0 0.0
    %884 = vmatprep.subr.mxu0 0.0
    %885 = vmatpush1.msra.mxu0 0.0
    %886 = vmatprep.subr.mxu0 0.0
    %887 = vmatpush1.msra.mxu0 0.0
    %888 = vmatprep.subr.mxu0 0.0
    %889 = vmatpush1.msra.mxu0 0.0
    %890 = vmatprep.subr.mxu0 0.0
    %891 = vmatpush1.msra.mxu0 0.0
    %892 = vmatprep.subr.mxu0 0.0
    %893 = vmatpush1.msra.mxu0 0.0
    %894 = vmatprep.subr.mxu0 0.0
    %895 = vmatpush1.msra.mxu0 0.0
    %896 = vmatprep.subr.mxu0 0.0
    %897 = vmatpush1.msra.mxu0 0.0
    %898 = vmatprep.subr.mxu0 0.0
    %899 = vmatpush1.msra.mxu0 0.0
    %900 = vmatprep.subr.mxu0 0.0
    %901 = vmatpush1.msra.mxu0 0.0
    %902 = vmatprep.subr.mxu0 0.0
    %903 = vmatpush1.msra.mxu0 0.0
    %904 = vmatprep.subr.mxu0 0.0
    %905 = vmatpush1.msra.mxu0 0.0
    %906 = vmatprep.subr.mxu0 0.0
    %907 = vmatpush1.msra.mxu0 0.0
    %908 = vmatprep.subr.mxu0 0.0
    %909 = vmatpush1.msra.mxu0 0.0
    %910 = vmatprep.mubr.f32.mxu0 0.0
    %911 = vmatmul.mubr.f32.gmra.mrb[0].mxu0 %v844
    %v912 = vpop.f32.mrb[0].mxu0
    %v913 = vadd.f32 0.0, %v912
    %v914 = vpop.f32.mrb[0].mxu0
    %915 = vdwg.mxu0
    %916 = vrot.lane.b32.xlu0 %v264, 64
    %v917 = vpop.permute.xlu0 %916
    %918 = vrot.lane.b32.xlu0 %v375, 64
    %v919 = vpop.permute.xlu0 %918
    %920 = vrot.lane.b32.xlu0 %v378, 64
    %v921 = vpop.permute.xlu0 %920
    %922 = vrot.lane.b32.xlu0 %v383, 64
    %v923 = vpop.permute.xlu0 %922
    %924 = vrot.lane.b32.xlu0 %v386, 64
    %v925 = vpop.permute.xlu0 %924
    %926 = vrot.lane.b32.xlu0 %v391, 64
    %v927 = vpop.permute.xlu0 %926
    %928 = vrot.lane.b32.xlu0 %v394, 64
    %v929 = vpop.permute.xlu0 %928
    %v930 = vsel %vm529, %v917, 0
    %v932 = vsel %vm529, %v919, 0
    %v934 = vsel %vm529, %v921, 0
    %v936 = vsel %vm529, %v923, 0
    %v938 = vsel %vm529, %v925, 0
    %v940 = vsel %vm529, %v927, 0
    %v942 = vsel %vm529, %v929, 0
    %944 = vmatprep.subr.mxu0 0.0
    %945 = vmatpush1.xpose.msra.mxu0 %v932
    %946 = vmatprep.subr.mxu0 0.0
    %947 = vmatpush1.xpose.msra.mxu0 %v934
    %948 = vmatprep.subr.mxu0 0.0
    %949 = vmatpush1.xpose.msra.mxu0 %v936
    %950 = vmatprep.subr.mxu0 0.0
    %951 = vmatpush1.xpose.msra.mxu0 %v938
    %952 = vmatprep.subr.mxu0 0.0
    %953 = vmatpush1.xpose.msra.mxu0 %v940
    %954 = vmatprep.subr.mxu0 0.0
    %955 = vmatpush1.xpose.msra.mxu0 %v942
    %956 = vmatprep.subr.mxu0 0.0
    %957 = vmatpush1.xpose.msra.mxu0 0.0
    %958 = vmatprep.subr.mxu0 0.0
    %959 = vmatpush1.xpose.msra.mxu0 0.0
    %960 = vmatprep.subr.mxu0 0.0
    %961 = vmatpush1.xpose.msra.mxu0 0.0
    %962 = vmatprep.subr.mxu0 0.0
    %963 = vmatpush1.xpose.msra.mxu0 0.0
    %964 = vmatprep.subr.mxu0 0.0
    %965 = vmatpush1.xpose.msra.mxu0 0.0
    %966 = vmatprep.subr.mxu0 0.0
    %967 = vmatpush1.xpose.msra.mxu0 0.0
    %968 = vmatprep.subr.mxu0 0.0
    %969 = vmatpush1.xpose.msra.mxu0 0.0
    %970 = vmatprep.subr.mxu0 0.0
    %971 = vmatpush1.xpose.msra.mxu0 0.0
    %972 = vmatprep.subr.mxu0 0.0
    %973 = vmatpush1.xpose.msra.mxu0 0.0
    %974 = vmatprep.subr.mxu0 0.0
    %975 = vmatpush1.xpose.msra.mxu0 0.0
    %976 = vmatprep.subr.mxu0 0.0
    %977 = vmatpush1.xpose.msra.mxu0 0.0
    %978 = vmatprep.subr.mxu0 0.0
    %979 = vmatpush1.xpose.msra.mxu0 0.0
    %980 = vmatprep.subr.mxu0 0.0
    %981 = vmatpush1.xpose.msra.mxu0 0.0
    %982 = vmatprep.subr.mxu0 0.0
    %983 = vmatpush1.xpose.msra.mxu0 0.0
    %984 = vmatprep.subr.mxu0 0.0
    %985 = vmatpush1.xpose.msra.mxu0 0.0
    %986 = vmatprep.subr.mxu0 0.0
    %987 = vmatpush1.xpose.msra.mxu0 0.0
    %988 = vmatprep.subr.mxu0 0.0
    %989 = vmatpush1.xpose.msra.mxu0 0.0
    %990 = vmatprep.subr.mxu0 0.0
    %991 = vmatpush1.xpose.msra.mxu0 0.0
    %992 = vmatprep.subr.mxu0 0.0
    %993 = vmatpush1.xpose.msra.mxu0 0.0
    %994 = vmatprep.subr.mxu0 0.0
    %995 = vmatpush1.xpose.msra.mxu0 0.0
    %996 = vmatprep.subr.mxu0 0.0
    %997 = vmatpush1.xpose.msra.mxu0 0.0
    %998 = vmatprep.subr.mxu0 0.0
    %999 = vmatpush1.xpose.msra.mxu0 0.0
    %1000 = vmatprep.subr.mxu0 0.0
    %1001 = vmatpush1.xpose.msra.mxu0 0.0
    %1002 = vmatprep.subr.mxu0 0.0
    %1003 = vmatpush1.xpose.msra.mxu0 0.0
    %1004 = vmatprep.subr.mxu0 0.0
    %1005 = vmatpush1.xpose.msra.mxu0 0.0
    %1006 = vmatprep.subr.mxu0 0.0
    %1007 = vmatpush1.xpose.msra.mxu0 0.0
    %1008 = vmatprep.mubr.f32.mxu0 0.0
    %1009 = vmatmul.mubr.f32.gmra.mrb[0].mxu0 %v930
    %v1010 = vpop.f32.mrb[0].mxu0
    %v1011 = vadd.f32 0.0, %v1010
    %v1012 = vpop.f32.mrb[0].mxu0
    %1013 = vdwg.mxu0
    %v1014 = vsel %vm528, %v1011, -1e+30
    %v1015 = vsel %vm622, %v1014, -inf
    %1016 = vmax.xlane.f32.xlu0 %v1015
    %v1017 = vpop.xlane.xlu0 %1016
    %v1018 = vsub.f32 %v1014, %v1017
    %v1019 = vmul.f32 %v1018, 1.442695
    %v1020 = vpow.pop %v1019
    %v1021 = vsel %vm622, %v1020, 0.0
    %1022 = vadd.xlane.f32.xlu0 %v1021
    %v1023 = vpop.xlane.xlu0 %1022
    %v1024 = vrcp.pop %v1023
    %v1025 = vmul.f32 %v1020, %v1024
    %v1026 = vadd.f32 %v818, %v1025
    %1027 = vrot.lane.b32.xlu0 %v503, 64
    %v1028 = vpop.permute.xlu0 %1027
    %1029 = vrot.lane.b32.xlu0 %v506, 64
    %v1030 = vpop.permute.xlu0 %1029
    %1031 = vrot.lane.b32.xlu0 %v511, 64
    %v1032 = vpop.permute.xlu0 %1031
    %1033 = vrot.lane.b32.xlu0 %v514, 64
    %v1034 = vpop.permute.xlu0 %1033
    %1035 = vrot.lane.b32.xlu0 %v519, 64
    %v1036 = vpop.permute.xlu0 %1035
    %1037 = vrot.lane.b32.xlu0 %v522, 64
    %v1038 = vpop.permute.xlu0 %1037
    %v1046 = vsel %vm622, %v1025, 0
    %1048 = vmatprep.subr.mxu0 0.0
    %1049 = vmatpush1.msra.mxu0 %v1028
    %1050 = vmatprep.subr.mxu0 0.0
    %1051 = vmatpush1.msra.mxu0 %v1030
    %1052 = vmatprep.subr.mxu0 0.0
    %1053 = vmatpush1.msra.mxu0 %v1032
    %1054 = vmatprep.subr.mxu0 0.0
    %1055 = vmatpush1.msra.mxu0 %v1034
    %1056 = vmatprep.subr.mxu0 0.0
    %1057 = vmatpush1.msra.mxu0 %v1036
    %1058 = vmatprep.subr.mxu0 0.0
    %1059 = vmatpush1.msra.mxu0 %v1038
    %1060 = vmatprep.subr.mxu0 0.0
    %1061 = vmatpush1.msra.mxu0 0.0
    %1062 = vmatprep.subr.mxu0 0.0
    %1063 = vmatpush1.msra.mxu0 0.0
    %1064 = vmatprep.subr.mxu0 0.0
    %1065 = vmatpush1.msra.mxu0 0.0
    %1066 = vmatprep.subr.mxu0 0.0
    %1067 = vmatpush1.msra.mxu0 0.0
    %1068 = vmatprep.subr.mxu0 0.0
    %1069 = vmatpush1.msra.mxu0 0.0
    %1070 = vmatprep.subr.mxu0 0.0
    %1071 = vmatpush1.msra.mxu0 0.0
    %1072 = vmatprep.subr.mxu0 0.0
    %1073 = vmatpush1.msra.mxu0 0.0
    %1074 = vmatprep.subr.mxu0 0.0
    %1075 = vmatpush1.msra.mxu0 0.0
    %1076 = vmatprep.subr.mxu0 0.0
    %1077 = vmatpush1.msra.mxu0 0.0
    %1078 = vmatprep.subr.mxu0 0.0
    %1079 = vmatpush1.msra.mxu0 0.0
    %1080 = vmatprep.subr.mxu0 0.0
    %1081 = vmatpush1.msra.mxu0 0.0
    %1082 = vmatprep.subr.mxu0 0.0
    %1083 = vmatpush1.msra.mxu0 0.0
    %1084 = vmatprep.subr.mxu0 0.0
    %1085 = vmatpush1.msra.mxu0 0.0
    %1086 = vmatprep.subr.mxu0 0.0
    %1087 = vmatpush1.msra.mxu0 0.0
    %1088 = vmatprep.subr.mxu0 0.0
    %1089 = vmatpush1.msra.mxu0 0.0
    %1090 = vmatprep.subr.mxu0 0.0
    %1091 = vmatpush1.msra.mxu0 0.0
    %1092 = vmatprep.subr.mxu0 0.0
    %1093 = vmatpush1.msra.mxu0 0.0
    %1094 = vmatprep.subr.mxu0 0.0
    %1095 = vmatpush1.msra.mxu0 0.0
    %1096 = vmatprep.subr.mxu0 0.0
    %1097 = vmatpush1.msra.mxu0 0.0
    %1098 = vmatprep.subr.mxu0 0.0
    %1099 = vmatpush1.msra.mxu0 0.0
    %1100 = vmatprep.subr.mxu0 0.0
    %1101 = vmatpush1.msra.mxu0 0.0
    %1102 = vmatprep.subr.mxu0 0.0
    %1103 = vmatpush1.msra.mxu0 0.0
    %1104 = vmatprep.subr.mxu0 0.0
    %1105 = vmatpush1.msra.mxu0 0.0
    %1106 = vmatprep.subr.mxu0 0.0
    %1107 = vmatpush1.msra.mxu0 0.0
    %1108 = vmatprep.subr.mxu0 0.0
    %1109 = vmatpush1.msra.mxu0 0.0
    %1110 = vmatprep.subr.mxu0 0.0
    %1111 = vmatpush1.msra.mxu0 0.0
    %1112 = vmatprep.mubr.f32.mxu0 0.0
    %1113 = vmatmul.mubr.f32.gmra.mrb[0].mxu0 %v1046
    %v1114 = vpop.f32.mrb[0].mxu0
    %v1115 = vadd.f32 0.0, %v1114
    %v1116 = vpop.f32.mrb[0].mxu0
    %1117 = vdwg.mxu0
    %1118 = vrot.lane.b32.xlu0 %v264, 32
    %v1119 = vpop.permute.xlu0 %1118
    %1120 = vrot.lane.b32.xlu0 %v375, 32
    %v1121 = vpop.permute.xlu0 %1120
    %1122 = vrot.lane.b32.xlu0 %v378, 32
    %v1123 = vpop.permute.xlu0 %1122
    %1124 = vrot.lane.b32.xlu0 %v383, 32
    %v1125 = vpop.permute.xlu0 %1124
    %1126 = vrot.lane.b32.xlu0 %v386, 32
    %v1127 = vpop.permute.xlu0 %1126
    %1128 = vrot.lane.b32.xlu0 %v391, 32
    %v1129 = vpop.permute.xlu0 %1128
    %1130 = vrot.lane.b32.xlu0 %v394, 32
    %v1131 = vpop.permute.xlu0 %1130
    %v1132 = vsel %vm529, %v1119, 0
    %v1134 = vsel %vm529, %v1121, 0
    %v1136 = vsel %vm529, %v1123, 0
    %v1138 = vsel %vm529, %v1125, 0
    %v1140 = vsel %vm529, %v1127, 0
    %v1142 = vsel %vm529, %v1129, 0
    %v1144 = vsel %vm529, %v1131, 0
    %1146 = vmatprep.subr.mxu0 0.0
    %1147 = vmatpush1.xpose.msra.mxu0 %v1134
    %1148 = vmatprep.subr.mxu0 0.0
    %1149 = vmatpush1.xpose.msra.mxu0 %v1136
    %1150 = vmatprep.subr.mxu0 0.0
    %1151 = vmatpush1.xpose.msra.mxu0 %v1138
    %1152 = vmatprep.subr.mxu0 0.0
    %1153 = vmatpush1.xpose.msra.mxu0 %v1140
    %1154 = vmatprep.subr.mxu0 0.0
    %1155 = vmatpush1.xpose.msra.mxu0 %v1142
    %1156 = vmatprep.subr.mxu0 0.0
    %1157 = vmatpush1.xpose.msra.mxu0 %v1144
    %1158 = vmatprep.subr.mxu0 0.0
    %1159 = vmatpush1.xpose.msra.mxu0 0.0
    %1160 = vmatprep.subr.mxu0 0.0
    %1161 = vmatpush1.xpose.msra.mxu0 0.0
    %1162 = vmatprep.subr.mxu0 0.0
    %1163 = vmatpush1.xpose.msra.mxu0 0.0
    %1164 = vmatprep.subr.mxu0 0.0
    %1165 = vmatpush1.xpose.msra.mxu0 0.0
    %1166 = vmatprep.subr.mxu0 0.0
    %1167 = vmatpush1.xpose.msra.mxu0 0.0
    %1168 = vmatprep.subr.mxu0 0.0
    %1169 = vmatpush1.xpose.msra.mxu0 0.0
    %1170 = vmatprep.subr.mxu0 0.0
    %1171 = vmatpush1.xpose.msra.mxu0 0.0
    %1172 = vmatprep.subr.mxu0 0.0
    %1173 = vmatpush1.xpose.msra.mxu0 0.0
    %1174 = vmatprep.subr.mxu0 0.0
    %1175 = vmatpush1.xpose.msra.mxu0 0.0
    %1176 = vmatprep.subr.mxu0 0.0
    %1177 = vmatpush1.xpose.msra.mxu0 0.0
    %1178 = vmatprep.subr.mxu0 0.0
    %1179 = vmatpush1.xpose.msra.mxu0 0.0
    %1180 = vmatprep.subr.mxu0 0.0
    %1181 = vmatpush1.xpose.msra.mxu0 0.0
    %1182 = vmatprep.subr.mxu0 0.0
    %1183 = vmatpush1.xpose.msra.mxu0 0.0
    %1184 = vmatprep.subr.mxu0 0.0
    %1185 = vmatpush1.xpose.msra.mxu0 0.0
    %1186 = vmatprep.subr.mxu0 0.0
    %1187 = vmatpush1.xpose.msra.mxu0 0.0
    %1188 = vmatprep.subr.mxu0 0.0
    %1189 = vmatpush1.xpose.msra.mxu0 0.0
    %1190 = vmatprep.subr.mxu0 0.0
    %1191 = vmatpush1.xpose.msra.mxu0 0.0
    %1192 = vmatprep.subr.mxu0 0.0
    %1193 = vmatpush1.xpose.msra.mxu0 0.0
    %1194 = vmatprep.subr.mxu0 0.0
    %1195 = vmatpush1.xpose.msra.mxu0 0.0
    %1196 = vmatprep.subr.mxu0 0.0
    %1197 = vmatpush1.xpose.msra.mxu0 0.0
    %1198 = vmatprep.subr.mxu0 0.0
    %1199 = vmatpush1.xpose.msra.mxu0 0.0
    %1200 = vmatprep.subr.mxu0 0.0
    %1201 = vmatpush1.xpose.msra.mxu0 0.0
    %1202 = vmatprep.subr.mxu0 0.0
    %1203 = vmatpush1.xpose.msra.mxu0 0.0
    %1204 = vmatprep.subr.mxu0 0.0
    %1205 = vmatpush1.xpose.msra.mxu0 0.0
    %1206 = vmatprep.subr.mxu0 0.0
    %1207 = vmatpush1.xpose.msra.mxu0 0.0
    %1208 = vmatprep.subr.mxu0 0.0
    %1209 = vmatpush1.xpose.msra.mxu0 0.0
    %1210 = vmatprep.mubr.f32.mxu0 0.0
    %1211 = vmatmul.mubr.f32.gmra.mrb[0].mxu0 %v1132
    %v1212 = vpop.f32.mrb[0].mxu0
    %v1213 = vadd.f32 0.0, %v1212
    %v1214 = vpop.f32.mrb[0].mxu0
    %1215 = vdwg.mxu0
    %v1216 = vsel %vm528, %v1213, -1e+30
    %v1217 = vsel %vm622, %v1216, -inf
    %1218 = vmax.xlane.f32.xlu0 %v1217
    %v1219 = vpop.xlane.xlu0 %1218
    %v1220 = vsub.f32 %v1216, %v1219
    %v1221 = vmul.f32 %v1220, 1.442695
    %v1222 = vpow.pop %v1221
    %v1223 = vsel %vm622, %v1222, 0.0
    %1224 = vadd.xlane.f32.xlu0 %v1223
    %v1225 = vpop.xlane.xlu0 %1224
    %v1226 = vrcp.pop %v1225
    %v1227 = vmul.f32 %v1222, %v1226
    %v1228 = vadd.f32 %v1026, %v1227
    %1229 = vrot.lane.b32.xlu0 %v503, 32
    %v1230 = vpop.permute.xlu0 %1229
    %1231 = vrot.lane.b32.xlu0 %v506, 32
    %v1232 = vpop.permute.xlu0 %1231
    %1233 = vrot.lane.b32.xlu0 %v511, 32
    %v1234 = vpop.permute.xlu0 %1233
    %1235 = vrot.lane.b32.xlu0 %v514, 32
    %v1236 = vpop.permute.xlu0 %1235
    %1237 = vrot.lane.b32.xlu0 %v519, 32
    %v1238 = vpop.permute.xlu0 %1237
    %1239 = vrot.lane.b32.xlu0 %v522, 32
    %v1240 = vpop.permute.xlu0 %1239
    %v1248 = vsel %vm622, %v1227, 0
    %1250 = vmatprep.subr.mxu0 0.0
    %1251 = vmatpush1.msra.mxu0 %v1230
    %1252 = vmatprep.subr.mxu0 0.0
    %1253 = vmatpush1.msra.mxu0 %v1232
    %1254 = vmatprep.subr.mxu0 0.0
    %1255 = vmatpush1.msra.mxu0 %v1234
    %1256 = vmatprep.subr.mxu0 0.0
    %1257 = vmatpush1.msra.mxu0 %v1236
    %1258 = vmatprep.subr.mxu0 0.0
    %1259 = vmatpush1.msra.mxu0 %v1238
    %1260 = vmatprep.subr.mxu0 0.0
    %1261 = vmatpush1.msra.mxu0 %v1240
    %1262 = vmatprep.subr.mxu0 0.0
    %1263 = vmatpush1.msra.mxu0 0.0
    %1264 = vmatprep.subr.mxu0 0.0
    %1265 = vmatpush1.msra.mxu0 0.0
    %1266 = vmatprep.subr.mxu0 0.0
    %1267 = vmatpush1.msra.mxu0 0.0
    %1268 = vmatprep.subr.mxu0 0.0
    %1269 = vmatpush1.msra.mxu0 0.0
    %1270 = vmatprep.subr.mxu0 0.0
    %1271 = vmatpush1.msra.mxu0 0.0
    %1272 = vmatprep.subr.mxu0 0.0
    %1273 = vmatpush1.msra.mxu0 0.0
    %1274 = vmatprep.subr.mxu0 0.0
    %1275 = vmatpush1.msra.mxu0 0.0
    %1276 = vmatprep.subr.mxu0 0.0
    %1277 = vmatpush1.msra.mxu0 0.0
    %1278 = vmatprep.subr.mxu0 0.0
    %1279 = vmatpush1.msra.mxu0 0.0
    %1280 = vmatprep.subr.mxu0 0.0
    %1281 = vmatpush1.msra.mxu0 0.0
    %1282 = vmatprep.subr.mxu0 0.0
    %1283 = vmatpush1.msra.mxu0 0.0
    %1284 = vmatprep.subr.mxu0 0.0
    %1285 = vmatpush1.msra.mxu0 0.0
    %1286 = vmatprep.subr.mxu0 0.0
    %1287 = vmatpush1.msra.mxu0 0.0
    %1288 = vmatprep.subr.mxu0 0.0
    %1289 = vmatpush1.msra.mxu0 0.0
    %1290 = vmatprep.subr.mxu0 0.0
    %1291 = vmatpush1.msra.mxu0 0.0
    %1292 = vmatprep.subr.mxu0 0.0
    %1293 = vmatpush1.msra.mxu0 0.0
    %1294 = vmatprep.subr.mxu0 0.0
    %1295 = vmatpush1.msra.mxu0 0.0
    %1296 = vmatprep.subr.mxu0 0.0
    %1297 = vmatpush1.msra.mxu0 0.0
    %1298 = vmatprep.subr.mxu0 0.0
    %1299 = vmatpush1.msra.mxu0 0.0
    %1300 = vmatprep.subr.mxu0 0.0
    %1301 = vmatpush1.msra.mxu0 0.0
    %1302 = vmatprep.subr.mxu0 0.0
    %1303 = vmatpush1.msra.mxu0 0.0
    %1304 = vmatprep.subr.mxu0 0.0
    %1305 = vmatpush1.msra.mxu0 0.0
    %1306 = vmatprep.subr.mxu0 0.0
    %1307 = vmatpush1.msra.mxu0 0.0
    %1308 = vmatprep.subr.mxu0 0.0
    %1309 = vmatpush1.msra.mxu0 0.0
    %1310 = vmatprep.subr.mxu0 0.0
    %1311 = vmatpush1.msra.mxu0 0.0
    %1312 = vmatprep.subr.mxu0 0.0
    %1313 = vmatpush1.msra.mxu0 0.0
    %1314 = vmatprep.mubr.f32.mxu0 0.0
    %1315 = vmatmul.mubr.f32.gmra.mrb[0].mxu0 %v1248
    %v1316 = vpop.f32.mrb[0].mxu0
    %v1317 = vadd.f32 0.0, %v1316
    %v1318 = vpop.f32.mrb[0].mxu0
    %1319 = vdwg.mxu0
    %1321 = vrot.lane.b32.xlu0 %v913, 32
    %v1322 = vpop.permute.xlu0 %1321
    %1325 = vrot.lane.b32.xlu0 %v1115, 64
    %v1326 = vpop.permute.xlu0 %1325
    %1329 = vrot.lane.b32.xlu0 %v1317, 96
    %v1330 = vpop.permute.xlu0 %1329
    %v1332 = vsel %vm529, %v705, %v1322
    %vm1333 = vcmask 523264
    %v1334 = vsel %vm1333, %v1332, %v1326
    %vm1335 = vcmask 785408
    %v1336 = vsel %vm1335, %v1334, %v1330
    %v1337 = vpack.c.bf16 %v1336, %v1336
    %v1338 = vld [vmem:[#allocation8] sm:$0xf]
    %v1339 = vld [vmem:[#allocation8 + $0x4] sm:$0xf]
    %v1340 = vld [vmem:[#allocation8 + $0x8] sm:$0xf]
    %v1341 = vld [vmem:[#allocation8 + $0xc] sm:$0xf]
    %v1342 = vld [vmem:[#allocation8 + $0x10] sm:$0xf]
    %v1343 = vld [vmem:[#allocation8 + $0x14] sm:$0xf]
    %v1344 = vld [vmem:[#allocation8 + $0x18] sm:$0xf]
    %v1345 = vld [vmem:[#allocation8 + $0x1c] sm:$0xf]
    %v1346 = vld [vmem:[#allocation8 + $0x20] sm:$0xf]
    %v1347 = vld [vmem:[#allocation8 + $0x24] sm:$0xf]
    %v1348 = vld [vmem:[#allocation8 + $0x28] sm:$0xf]
    %v1349 = vld [vmem:[#allocation8 + $0x2c] sm:$0xf]
    %v1350 = vld [vmem:[#allocation8 + $0x30] sm:$0xf]
    %v1351 = vld [vmem:[#allocation8 + $0x34] sm:$0xf]
    %v1352 = vld [vmem:[#allocation8 + $0x38] sm:$0xf]
    %v1353 = vld [vmem:[#allocation8 + $0x3c] sm:$0xf]
    %v1354 = vld [vmem:[%s12] sm:$0x1]
    %v1356 = vlaneseq
    %v1357 = vshrl.u32 %v1356, 7
    %v1358 = vsub.s32 0, %v1357
    %v1359 = vrot.slane %v1354, %v1358
    %v1377 = vunpack.c.l.b16 %v1338
    %v1378 = vunpack.c.l.b16 %v1339
    %v1379 = vunpack.c.l.b16 %v1340
    %v1380 = vunpack.c.l.b16 %v1341
    %v1381 = vunpack.c.l.b16 %v1342
    %v1382 = vunpack.c.l.b16 %v1343
    %v1383 = vunpack.c.l.b16 %v1344
    %v1384 = vunpack.c.l.b16 %v1345
    %v1385 = vunpack.c.l.b16 %v1346
    %v1386 = vunpack.c.l.b16 %v1347
    %v1387 = vunpack.c.l.b16 %v1348
    %v1388 = vunpack.c.l.b16 %v1349
    %v1389 = vunpack.c.l.b16 %v1350
    %v1390 = vunpack.c.l.b16 %v1351
    %v1391 = vunpack.c.l.b16 %v1352
    %v1392 = vunpack.c.l.b16 %v1353
    %v1393 = vpack.c.b16 %v1378, %v1377
    %v1394 = vpack.c.b16 %v1380, %v1379
    %v1395 = vpack.c.b16 %v1382, %v1381
    %v1396 = vpack.c.b16 %v1384, %v1383
    %v1397 = vpack.c.b16 %v1386, %v1385
    %v1398 = vpack.c.b16 %v1388, %v1387
    %v1399 = vpack.c.b16 %v1390, %v1389
    %v1400 = vpack.c.b16 %v1392, %v1391
    %1409 = vmatprep.subr.bf16.mxu0 0
    %1410 = vmatpush1.bf16.msra.mxu0 %v1393
    %1411 = vmatprep.subr.bf16.mxu0 0
    %1412 = vmatpush1.bf16.msra.mxu0 %v1394
    %1413 = vmatprep.subr.bf16.mxu0 0
    %1414 = vmatpush1.bf16.msra.mxu0 %v1395
    %1415 = vmatprep.subr.bf16.mxu0 0
    %1416 = vmatpush1.bf16.msra.mxu0 %v1396
    %1417 = vmatprep.subr.bf16.mxu0 0
    %1418 = vmatpush1.bf16.msra.mxu0 %v1397
    %1419 = vmatprep.subr.bf16.mxu0 0
    %1420 = vmatpush1.bf16.msra.mxu0 %v1398
    %1421 = vmatprep.subr.bf16.mxu0 0
    %1422 = vmatpush1.bf16.msra.mxu0 %v1399
    %1423 = vmatprep.subr.bf16.mxu0 0
    %1424 = vmatpush1.bf16.msra.mxu0 %v1400
    %1425 = vmatprep.subr.bf16.mxu0 0
    %1426 = vmatpush1.bf16.msra.mxu0 0
    %1427 = vmatprep.subr.bf16.mxu0 0
    %1428 = vmatpush1.bf16.msra.mxu0 0
    %1429 = vmatprep.subr.bf16.mxu0 0
    %1430 = vmatpush1.bf16.msra.mxu0 0
    %1431 = vmatprep.subr.bf16.mxu0 0
    %1432 = vmatpush1.bf16.msra.mxu0 0
    %1433 = vmatprep.subr.bf16.mxu0 0
    %1434 = vmatpush1.bf16.msra.mxu0 0
    %1435 = vmatprep.subr.bf16.mxu0 0
    %1436 = vmatpush1.bf16.msra.mxu0 0
    %1437 = vmatprep.subr.bf16.mxu0 0
    %1438 = vmatpush1.bf16.msra.mxu0 0
    %1439 = vmatprep.subr.bf16.mxu0 0
    %1440 = vmatpush1.bf16.msra.mxu0 0
    %1441 = vmatprep.mubr.bf16.mxu0 0
    %1442 = vmatmul.mubr.bf16.gmra.mrb[0].mxu0 %v1337
    %v1443 = vpop.f32.mrb[0].mxu0
    %v1444 = vadd.f32 %v1359, %v1443
    %v1445 = vpop.f32.mrb[0].mxu0
    %v1446 = vpop.f32.mrb[0].mxu0
    %v1447 = vpop.f32.mrb[0].mxu0
    %1448 = vdwg.mxu0
    %v1449 = vmul.f32 %v1228, 0.25
    %v1450 = vadd.f32 %v1449, 1e-08
    %v1451 = vlog2.pop %v1450
    %v1452 = vmul.f32 %v1451, 0.6931472
    %v1453 = vmul.f32 %v1449, %v1452
    %v1454 = vsel %vm622, %v1453, 0.0
    %1455 = vadd.xlane.f32.xlu0 %v1454
    %v1456 = vpop.xlane.xlu0 %1455
    %v1457 = vsub.f32 0.0, %v1456
    %1458 = vst [vmem:[%s24] sm:$0xff] %v1457
    %v1459 = vadd.f32 %v146, %v1444
    %v1460 = vld [vmem:[%s13] sm:$0x1]
    %v1461 = vld [vmem:[%s14] sm:$0x1]
    %1462 = vadd.xlane.f32.xlu0 %v1459
    %v1463 = vpop.xlane.xlu0 %1462
    %v1464 = vrcp.pop 128.0
    %v1465 = vmul.f32 %v1463, %v1464
    %v1466 = vsub.f32 %v1459, %v1465
    %v1467 = vmul.f32 %v1466, %v1466
    %1468 = vadd.xlane.f32.xlu0 %v1467
    %v1469 = vpop.xlane.xlu0 %1468
    %v1470 = vmul.f32 %v1469, %v1464
    %v1471 = vadd.f32 %v1470, 1e-05
    %v1472 = vrsqrt.pop %v1471
    %v1473 = vmul.f32 %v1466, %v1472
    %v1475 = vlaneseq
    %v1476 = vshrl.u32 %v1475, 7
    %v1477 = vsub.s32 0, %v1476
    %v1478 = vrot.slane %v1460, %v1477
    %v1480 = vmul.f32 %v1473, %v1478
    %v1482 = vlaneseq
    %v1483 = vshrl.u32 %v1482, 7
    %v1484 = vsub.s32 0, %v1483
    %v1485 = vrot.slane %v1461, %v1484
    %v1487 = vadd.f32 %v1480, %v1485
    %v1488 = vpack.c.bf16 %v1487, %v1487
    %v1489 = vld [vmem:[%s15] sm:$0xff]
    %v1490 = vld [vmem:[%s15 + $0x8] sm:$0xff]
    %v1491 = vld [vmem:[%s15 + $0x10] sm:$0xff]
    %v1492 = vld [vmem:[%s15 + $0x18] sm:$0xff]
    %v1493 = vld [vmem:[%s15 + $0x20] sm:$0xff]
    %v1494 = vld [vmem:[%s15 + $0x28] sm:$0xff]
    %v1495 = vld [vmem:[%s15 + $0x30] sm:$0xff]
    %v1496 = vld [vmem:[%s15 + $0x38] sm:$0xff]
    %v1497 = vld [vmem:[%s15 + $0x40] sm:$0xff]
    %v1498 = vld [vmem:[%s15 + $0x48] sm:$0xff]
    %v1499 = vld [vmem:[%s15 + $0x50] sm:$0xff]
    %v1500 = vld [vmem:[%s15 + $0x58] sm:$0xff]
    %v1501 = vld [vmem:[%s15 + $0x60] sm:$0xff]
    %v1502 = vld [vmem:[%s15 + $0x68] sm:$0xff]
    %v1503 = vld [vmem:[%s15 + $0x70] sm:$0xff]
    %v1504 = vld [vmem:[%s15 + $0x78] sm:$0xff]
    %v1505 = vld [vmem:[%s15 + $0x80] sm:$0xff]
    %v1506 = vld [vmem:[%s15 + $0x88] sm:$0xff]
    %v1507 = vld [vmem:[%s15 + $0x90] sm:$0xff]
    %v1508 = vld [vmem:[%s15 + $0x98] sm:$0xff]
    %v1509 = vld [vmem:[%s15 + $0xa0] sm:$0xff]
    %v1510 = vld [vmem:[%s15 + $0xa8] sm:$0xff]
    %v1511 = vld [vmem:[%s15 + $0xb0] sm:$0xff]
    %v1512 = vld [vmem:[%s15 + $0xb8] sm:$0xff]
    %v1513 = vld [vmem:[%s15 + $0xc0] sm:$0xff]
    %v1514 = vld [vmem:[%s15 + $0xc8] sm:$0xff]
    %v1515 = vld [vmem:[%s15 + $0xd0] sm:$0xff]
    %v1516 = vld [vmem:[%s15 + $0xd8] sm:$0xff]
    %v1517 = vld [vmem:[%s15 + $0xe0] sm:$0xff]
    %v1518 = vld [vmem:[%s15 + $0xe8] sm:$0xff]
    %v1519 = vld [vmem:[%s15 + $0xf0] sm:$0xff]
    %v1520 = vld [vmem:[%s15 + $0xf8] sm:$0xff]
    %v1521 = vld [vmem:[%s16] sm:$0xf]
    %v1523 = vlaneseq
    %v1524 = vshrl.u32 %v1523, 7
    %v1525 = vsub.s32 0, %v1524
    %v1526 = vrot.slane %v1521, %v1525
    %v1527 = vlaneseq
    %v1528 = vshrl.u32 %v1527, 7
    %v1529 = vsub.s32 1, %v1528
    %v1530 = vrot.slane %v1521, %v1529
    %v1531 = vlaneseq
    %v1532 = vshrl.u32 %v1531, 7
    %v1533 = vsub.s32 2, %v1532
    %v1534 = vrot.slane %v1521, %v1533
    %v1535 = vlaneseq
    %v1536 = vshrl.u32 %v1535, 7
    %v1537 = vsub.s32 3, %v1536
    %v1538 = vrot.slane %v1521, %v1537
    %v1575 = vunpack.c.l.b16 %v1489
    %v1576 = vunpack.c.h.b16 %v1489
    %v1577 = vunpack.c.l.b16 %v1490
    %v1578 = vunpack.c.h.b16 %v1490
    %v1579 = vunpack.c.l.b16 %v1491
    %v1580 = vunpack.c.h.b16 %v1491
    %v1581 = vunpack.c.l.b16 %v1492
    %v1582 = vunpack.c.h.b16 %v1492
    %v1583 = vunpack.c.l.b16 %v1493
    %v1584 = vunpack.c.h.b16 %v1493
    %v1585 = vunpack.c.l.b16 %v1494
    %v1586 = vunpack.c.h.b16 %v1494
    %v1587 = vunpack.c.l.b16 %v1495
    %v1588 = vunpack.c.h.b16 %v1495
    %v1589 = vunpack.c.l.b16 %v1496
    %v1590 = vunpack.c.h.b16 %v1496
    %v1591 = vunpack.c.l.b16 %v1497
    %v1592 = vunpack.c.h.b16 %v1497
    %v1593 = vunpack.c.l.b16 %v1498
    %v1594 = vunpack.c.h.b16 %v1498
    %v1595 = vunpack.c.l.b16 %v1499
    %v1596 = vunpack.c.h.b16 %v1499
    %v1597 = vunpack.c.l.b16 %v1500
    %v1598 = vunpack.c.h.b16 %v1500
    %v1599 = vunpack.c.l.b16 %v1501
    %v1600 = vunpack.c.h.b16 %v1501
    %v1601 = vunpack.c.l.b16 %v1502
    %v1602 = vunpack.c.h.b16 %v1502
    %v1603 = vunpack.c.l.b16 %v1503
    %v1604 = vunpack.c.h.b16 %v1503
    %v1605 = vunpack.c.l.b16 %v1504
    %v1606 = vunpack.c.h.b16 %v1504
    %v1607 = vunpack.c.l.b16 %v1505
    %v1608 = vunpack.c.h.b16 %v1505
    %v1609 = vunpack.c.l.b16 %v1506
    %v1610 = vunpack.c.h.b16 %v1506
    %v1611 = vunpack.c.l.b16 %v1507
    %v1612 = vunpack.c.h.b16 %v1507
    %v1613 = vunpack.c.l.b16 %v1508
    %v1614 = vunpack.c.h.b16 %v1508
    %v1615 = vunpack.c.l.b16 %v1509
    %v1616 = vunpack.c.h.b16 %v1509
    %v1617 = vunpack.c.l.b16 %v1510
    %v1618 = vunpack.c.h.b16 %v1510
    %v1619 = vunpack.c.l.b16 %v1511
    %v1620 = vunpack.c.h.b16 %v1511
    %v1621 = vunpack.c.l.b16 %v1512
    %v1622 = vunpack.c.h.b16 %v1512
    %v1623 = vunpack.c.l.b16 %v1513
    %v1624 = vunpack.c.h.b16 %v1513
    %v1625 = vunpack.c.l.b16 %v1514
    %v1626 = vunpack.c.h.b16 %v1514
    %v1627 = vunpack.c.l.b16 %v1515
    %v1628 = vunpack.c.h.b16 %v1515
    %v1629 = vunpack.c.l.b16 %v1516
    %v1630 = vunpack.c.h.b16 %v1516
    %v1631 = vunpack.c.l.b16 %v1517
    %v1632 = vunpack.c.h.b16 %v1517
    %v1633 = vunpack.c.l.b16 %v1518
    %v1634 = vunpack.c.h.b16 %v1518
    %v1635 = vunpack.c.l.b16 %v1519
    %v1636 = vunpack.c.h.b16 %v1519
    %v1637 = vunpack.c.l.b16 %v1520
    %v1638 = vunpack.c.h.b16 %v1520
    %v1639 = vpack.c.b16 %v1579, %v1575
    %v1640 = vpack.c.b16 %v1580, %v1576
    %v1641 = vpack.c.b16 %v1581, %v1577
    %v1642 = vpack.c.b16 %v1582, %v1578
    %v1643 = vpack.c.b16 %v1587, %v1583
    %v1644 = vpack.c.b16 %v1588, %v1584
    %v1645 = vpack.c.b16 %v1589, %v1585
    %v1646 = vpack.c.b16 %v1590, %v1586
    %v1647 = vpack.c.b16 %v1595, %v1591
    %v1648 = vpack.c.b16 %v1596, %v1592
    %v1649 = vpack.c.b16 %v1597, %v1593
    %v1650 = vpack.c.b16 %v1598, %v1594
    %v1651 = vpack.c.b16 %v1603, %v1599
    %v1652 = vpack.c.b16 %v1604, %v1600
    %v1653 = vpack.c.b16 %v1605, %v1601
    %v1654 = vpack.c.b16 %v1606, %v1602
    %v1655 = vpack.c.b16 %v1611, %v1607
    %v1656 = vpack.c.b16 %v1612, %v1608
    %v1657 = vpack.c.b16 %v1613, %v1609
    %v1658 = vpack.c.b16 %v1614, %v1610
    %v1659 = vpack.c.b16 %v1619, %v1615
    %v1660 = vpack.c.b16 %v1620, %v1616
    %v1661 = vpack.c.b16 %v1621, %v1617
    %v1662 = vpack.c.b16 %v1622, %v1618
    %v1663 = vpack.c.b16 %v1627, %v1623
    %v1664 = vpack.c.b16 %v1628, %v1624
    %v1665 = vpack.c.b16 %v1629, %v1625
    %v1666 = vpack.c.b16 %v1630, %v1626
    %v1667 = vpack.c.b16 %v1635, %v1631
    %v1668 = vpack.c.b16 %v1636, %v1632
    %v1669 = vpack.c.b16 %v1637, %v1633
    %v1670 = vpack.c.b16 %v1638, %v1634
    %1703 = vmatprep.subr.bf16.mxu0 %v1640
    %1704 = vmatpush1.bf16.msra.mxu0 %v1639
    %1705 = vmatprep.subr.bf16.mxu0 %v1644
    %1706 = vmatpush1.bf16.msra.mxu0 %v1643
    %1707 = vmatprep.subr.bf16.mxu0 %v1648
    %1708 = vmatpush1.bf16.msra.mxu0 %v1647
    %1709 = vmatprep.subr.bf16.mxu0 %v1652
    %1710 = vmatpush1.bf16.msra.mxu0 %v1651
    %1711 = vmatprep.subr.bf16.mxu0 %v1656
    %1712 = vmatpush1.bf16.msra.mxu0 %v1655
    %1713 = vmatprep.subr.bf16.mxu0 %v1660
    %1714 = vmatpush1.bf16.msra.mxu0 %v1659
    %1715 = vmatprep.subr.bf16.mxu0 %v1664
    %1716 = vmatpush1.bf16.msra.mxu0 %v1663
    %1717 = vmatprep.subr.bf16.mxu0 %v1668
    %1718 = vmatpush1.bf16.msra.mxu0 %v1667
    %1719 = vmatprep.subr.bf16.mxu0 0
    %1720 = vmatpush1.bf16.msra.mxu0 0
    %1721 = vmatprep.subr.bf16.mxu0 0
    %1722 = vmatpush1.bf16.msra.mxu0 0
    %1723 = vmatprep.subr.bf16.mxu0 0
    %1724 = vmatpush1.bf16.msra.mxu0 0
    %1725 = vmatprep.subr.bf16.mxu0 0
    %1726 = vmatpush1.bf16.msra.mxu0 0
    %1727 = vmatprep.subr.bf16.mxu0 0
    %1728 = vmatpush1.bf16.msra.mxu0 0
    %1729 = vmatprep.subr.bf16.mxu0 0
    %1730 = vmatpush1.bf16.msra.mxu0 0
    %1731 = vmatprep.subr.bf16.mxu0 0
    %1732 = vmatpush1.bf16.msra.mxu0 0
    %1733 = vmatprep.subr.bf16.mxu0 0
    %1734 = vmatpush1.bf16.msra.mxu0 0
    %1735 = vmatprep.mubr.bf16.mxu0 0
    %1736 = vmatmul.mubr.bf16.gmra.mrb[0].mxu0 %v1488
    %v1737 = vpop.f32.mrb[0].mxu0
    %v1738 = vadd.f32 %v1526, %v1737
    %v1739 = vpop.f32.mrb[0].mxu0
    %v1740 = vadd.f32 %v1530, %v1739
    %v1741 = vpop.f32.mrb[0].mxu0
    %v1742 = vpop.f32.mrb[0].mxu0
    %1743 = vdwg.mxu0
    %1744 = vmatprep.subr.bf16.mxu0 %v1642
    %1745 = vmatpush1.bf16.msra.mxu0 %v1641
    %1746 = vmatprep.subr.bf16.mxu0 %v1646
    %1747 = vmatpush1.bf16.msra.mxu0 %v1645
    %1748 = vmatprep.subr.bf16.mxu0 %v1650
    %1749 = vmatpush1.bf16.msra.mxu0 %v1649
    %1750 = vmatprep.subr.bf16.mxu0 %v1654
    %1751 = vmatpush1.bf16.msra.mxu0 %v1653
    %1752 = vmatprep.subr.bf16.mxu0 %v1658
    %1753 = vmatpush1.bf16.msra.mxu0 %v1657
    %1754 = vmatprep.subr.bf16.mxu0 %v1662
    %1755 = vmatpush1.bf16.msra.mxu0 %v1661
    %1756 = vmatprep.subr.bf16.mxu0 %v1666
    %1757 = vmatpush1.bf16.msra.mxu0 %v1665
    %1758 = vmatprep.subr.bf16.mxu0 %v1670
    %1759 = vmatpush1.bf16.msra.mxu0 %v1669
    %1760 = vmatprep.subr.bf16.mxu0 0
    %1761 = vmatpush1.bf16.msra.mxu0 0
    %1762 = vmatprep.subr.bf16.mxu0 0
    %1763 = vmatpush1.bf16.msra.mxu0 0
    %1764 = vmatprep.subr.bf16.mxu0 0
    %1765 = vmatpush1.bf16.msra.mxu0 0
    %1766 = vmatprep.subr.bf16.mxu0 0
    %1767 = vmatpush1.bf16.msra.mxu0 0
    %1768 = vmatprep.subr.bf16.mxu0 0
    %1769 = vmatpush1.bf16.msra.mxu0 0
    %1770 = vmatprep.subr.bf16.mxu0 0
    %1771 = vmatpush1.bf16.msra.mxu0 0
    %1772 = vmatprep.subr.bf16.mxu0 0
    %1773 = vmatpush1.bf16.msra.mxu0 0
    %1774 = vmatprep.subr.bf16.mxu0 0
    %1775 = vmatpush1.bf16.msra.mxu0 0
    %1776 = vmatprep.mubr.bf16.mxu0 0
    %1777 = vmatmul.mubr.bf16.gmra.mrb[0].mxu0 %v1488
    %v1778 = vpop.f32.mrb[0].mxu0
    %v1779 = vadd.f32 %v1534, %v1778
    %v1780 = vpop.f32.mrb[0].mxu0
    %v1781 = vadd.f32 %v1538, %v1780
    %v1782 = vpop.f32.mrb[0].mxu0
    %v1783 = vpop.f32.mrb[0].mxu0
    %1784 = vdwg.mxu0
    %v1785 = vmax.f32 %v1738, 0.0
    %v1786 = vmax.f32 %v1740, 0.0
    %v1787 = vmax.f32 %v1779, 0.0
    %v1788 = vmax.f32 %v1781, 0.0
    %v1789 = vpack.c.bf16 %v1785, %v1785
    %v1790 = vpack.c.bf16 %v1786, %v1786
    %v1791 = vpack.c.bf16 %v1787, %v1787
    %v1792 = vpack.c.bf16 %v1788, %v1788
    %v1793 = vld [vmem:[#allocation9] sm:$0xf]
    %v1794 = vld [vmem:[#allocation9 + $0x4] sm:$0xf]
    %v1795 = vld [vmem:[#allocation9 + $0x8] sm:$0xf]
    %v1796 = vld [vmem:[#allocation9 + $0xc] sm:$0xf]
    %v1797 = vld [vmem:[#allocation9 + $0x10] sm:$0xf]
    %v1798 = vld [vmem:[#allocation9 + $0x14] sm:$0xf]
    %v1799 = vld [vmem:[#allocation9 + $0x18] sm:$0xf]
    %v1800 = vld [vmem:[#allocation9 + $0x1c] sm:$0xf]
    %v1801 = vld [vmem:[#allocation9 + $0x20] sm:$0xf]
    %v1802 = vld [vmem:[#allocation9 + $0x24] sm:$0xf]
    %v1803 = vld [vmem:[#allocation9 + $0x28] sm:$0xf]
    %v1804 = vld [vmem:[#allocation9 + $0x2c] sm:$0xf]
    %v1805 = vld [vmem:[#allocation9 + $0x30] sm:$0xf]
    %v1806 = vld [vmem:[#allocation9 + $0x34] sm:$0xf]
    %v1807 = vld [vmem:[#allocation9 + $0x38] sm:$0xf]
    %v1808 = vld [vmem:[#allocation9 + $0x3c] sm:$0xf]
    %v1809 = vld [vmem:[#allocation9 + $0x40] sm:$0xf]
    %v1810 = vld [vmem:[#allocation9 + $0x44] sm:$0xf]
    %v1811 = vld [vmem:[#allocation9 + $0x48] sm:$0xf]
    %v1812 = vld [vmem:[#allocation9 + $0x4c] sm:$0xf]
    %v1813 = vld [vmem:[#allocation9 + $0x50] sm:$0xf]
    %v1814 = vld [vmem:[#allocation9 + $0x54] sm:$0xf]
    %v1815 = vld [vmem:[#allocation9 + $0x58] sm:$0xf]
    %v1816 = vld [vmem:[#allocation9 + $0x5c] sm:$0xf]
    %v1817 = vld [vmem:[#allocation9 + $0x60] sm:$0xf]
    %v1818 = vld [vmem:[#allocation9 + $0x64] sm:$0xf]
    %v1819 = vld [vmem:[#allocation9 + $0x68] sm:$0xf]
    %v1820 = vld [vmem:[#allocation9 + $0x6c] sm:$0xf]
    %v1821 = vld [vmem:[#allocation9 + $0x70] sm:$0xf]
    %v1822 = vld [vmem:[#allocation9 + $0x74] sm:$0xf]
    %v1823 = vld [vmem:[#allocation9 + $0x78] sm:$0xf]
    %v1824 = vld [vmem:[#allocation9 + $0x7c] sm:$0xf]
    %v1825 = vld [vmem:[#allocation9 + $0x80] sm:$0xf]
    %v1826 = vld [vmem:[#allocation9 + $0x84] sm:$0xf]
    %v1827 = vld [vmem:[#allocation9 + $0x88] sm:$0xf]
    %v1828 = vld [vmem:[#allocation9 + $0x8c] sm:$0xf]
    %v1829 = vld [vmem:[#allocation9 + $0x90] sm:$0xf]
    %v1830 = vld [vmem:[#allocation9 + $0x94] sm:$0xf]
    %v1831 = vld [vmem:[#allocation9 + $0x98] sm:$0xf]
    %v1832 = vld [vmem:[#allocation9 + $0x9c] sm:$0xf]
    %v1833 = vld [vmem:[#allocation9 + $0xa0] sm:$0xf]
    %v1834 = vld [vmem:[#allocation9 + $0xa4] sm:$0xf]
    %v1835 = vld [vmem:[#allocation9 + $0xa8] sm:$0xf]
    %v1836 = vld [vmem:[#allocation9 + $0xac] sm:$0xf]
    %v1837 = vld [vmem:[#allocation9 + $0xb0] sm:$0xf]
    %v1838 = vld [vmem:[#allocation9 + $0xb4] sm:$0xf]
    %v1839 = vld [vmem:[#allocation9 + $0xb8] sm:$0xf]
    %v1840 = vld [vmem:[#allocation9 + $0xbc] sm:$0xf]
    %v1841 = vld [vmem:[#allocation9 + $0xc0] sm:$0xf]
    %v1842 = vld [vmem:[#allocation9 + $0xc4] sm:$0xf]
    %v1843 = vld [vmem:[#allocation9 + $0xc8] sm:$0xf]
    %v1844 = vld [vmem:[#allocation9 + $0xcc] sm:$0xf]
    %v1845 = vld [vmem:[#allocation9 + $0xd0] sm:$0xf]
    %v1846 = vld [vmem:[#allocation9 + $0xd4] sm:$0xf]
    %v1847 = vld [vmem:[#allocation9 + $0xd8] sm:$0xf]
    %v1848 = vld [vmem:[#allocation9 + $0xdc] sm:$0xf]
    %v1849 = vld [vmem:[#allocation9 + $0xe0] sm:$0xf]
    %v1850 = vld [vmem:[#allocation9 + $0xe4] sm:$0xf]
    %v1851 = vld [vmem:[#allocation9 + $0xe8] sm:$0xf]
    %v1852 = vld [vmem:[#allocation9 + $0xec] sm:$0xf]
    %v1853 = vld [vmem:[#allocation9 + $0xf0] sm:$0xf]
    %v1854 = vld [vmem:[#allocation9 + $0xf4] sm:$0xf]
    %v1855 = vld [vmem:[#allocation9 + $0xf8] sm:$0xf]
    %v1856 = vld [vmem:[#allocation9 + $0xfc] sm:$0xf]
    %v1857 = vld [vmem:[%s18] sm:$0x1]
    %v1859 = vlaneseq
    %v1860 = vshrl.u32 %v1859, 7
    %v1861 = vsub.s32 0, %v1860
    %v1862 = vrot.slane %v1857, %v1861
    %v1928 = vunpack.c.l.b16 %v1793
    %v1929 = vunpack.c.l.b16 %v1794
    %v1930 = vunpack.c.l.b16 %v1795
    %v1931 = vunpack.c.l.b16 %v1796
    %v1932 = vunpack.c.l.b16 %v1797
    %v1933 = vunpack.c.l.b16 %v1798
    %v1934 = vunpack.c.l.b16 %v1799
    %v1935 = vunpack.c.l.b16 %v1800
    %v1936 = vunpack.c.l.b16 %v1801
    %v1937 = vunpack.c.l.b16 %v1802
    %v1938 = vunpack.c.l.b16 %v1803
    %v1939 = vunpack.c.l.b16 %v1804
    %v1940 = vunpack.c.l.b16 %v1805
    %v1941 = vunpack.c.l.b16 %v1806
    %v1942 = vunpack.c.l.b16 %v1807
    %v1943 = vunpack.c.l.b16 %v1808
    %v1944 = vunpack.c.l.b16 %v1809
    %v1945 = vunpack.c.l.b16 %v1810
    %v1946 = vunpack.c.l.b16 %v1811
    %v1947 = vunpack.c.l.b16 %v1812
    %v1948 = vunpack.c.l.b16 %v1813
    %v1949 = vunpack.c.l.b16 %v1814
    %v1950 = vunpack.c.l.b16 %v1815
    %v1951 = vunpack.c.l.b16 %v1816
    %v1952 = vunpack.c.l.b16 %v1817
    %v1953 = vunpack.c.l.b16 %v1818
    %v1954 = vunpack.c.l.b16 %v1819
    %v1955 = vunpack.c.l.b16 %v1820
    %v1956 = vunpack.c.l.b16 %v1821
    %v1957 = vunpack.c.l.b16 %v1822
    %v1958 = vunpack.c.l.b16 %v1823
    %v1959 = vunpack.c.l.b16 %v1824
    %v1960 = vunpack.c.l.b16 %v1825
    %v1961 = vunpack.c.l.b16 %v1826
    %v1962 = vunpack.c.l.b16 %v1827
    %v1963 = vunpack.c.l.b16 %v1828
    %v1964 = vunpack.c.l.b16 %v1829
    %v1965 = vunpack.c.l.b16 %v1830
    %v1966 = vunpack.c.l.b16 %v1831
    %v1967 = vunpack.c.l.b16 %v1832
    %v1968 = vunpack.c.l.b16 %v1833
    %v1969 = vunpack.c.l.b16 %v1834
    %v1970 = vunpack.c.l.b16 %v1835
    %v1971 = vunpack.c.l.b16 %v1836
    %v1972 = vunpack.c.l.b16 %v1837
    %v1973 = vunpack.c.l.b16 %v1838
    %v1974 = vunpack.c.l.b16 %v1839
    %v1975 = vunpack.c.l.b16 %v1840
    %v1976 = vunpack.c.l.b16 %v1841
    %v1977 = vunpack.c.l.b16 %v1842
    %v1978 = vunpack.c.l.b16 %v1843
    %v1979 = vunpack.c.l.b16 %v1844
    %v1980 = vunpack.c.l.b16 %v1845
    %v1981 = vunpack.c.l.b16 %v1846
    %v1982 = vunpack.c.l.b16 %v1847
    %v1983 = vunpack.c.l.b16 %v1848
    %v1984 = vunpack.c.l.b16 %v1849
    %v1985 = vunpack.c.l.b16 %v1850
    %v1986 = vunpack.c.l.b16 %v1851
    %v1987 = vunpack.c.l.b16 %v1852
    %v1988 = vunpack.c.l.b16 %v1853
    %v1989 = vunpack.c.l.b16 %v1854
    %v1990 = vunpack.c.l.b16 %v1855
    %v1991 = vunpack.c.l.b16 %v1856
    %v1992 = vpack.c.b16 %v1929, %v1928
    %v1993 = vpack.c.b16 %v1931, %v1930
    %v1994 = vpack.c.b16 %v1933, %v1932
    %v1995 = vpack.c.b16 %v1935, %v1934
    %v1996 = vpack.c.b16 %v1937, %v1936
    %v1997 = vpack.c.b16 %v1939, %v1938
    %v1998 = vpack.c.b16 %v1941, %v1940
    %v1999 = vpack.c.b16 %v1943, %v1942
    %v2000 = vpack.c.b16 %v1945, %v1944
    %v2001 = vpack.c.b16 %v1947, %v1946
    %v2002 = vpack.c.b16 %v1949, %v1948
    %v2003 = vpack.c.b16 %v1951, %v1950
    %v2004 = vpack.c.b16 %v1953, %v1952
    %v2005 = vpack.c.b16 %v1955, %v1954
    %v2006 = vpack.c.b16 %v1957, %v1956
    %v2007 = vpack.c.b16 %v1959, %v1958
    %v2008 = vpack.c.b16 %v1961, %v1960
    %v2009 = vpack.c.b16 %v1963, %v1962
    %v2010 = vpack.c.b16 %v1965, %v1964
    %v2011 = vpack.c.b16 %v1967, %v1966
    %v2012 = vpack.c.b16 %v1969, %v1968
    %v2013 = vpack.c.b16 %v1971, %v1970
    %v2014 = vpack.c.b16 %v1973, %v1972
    %v2015 = vpack.c.b16 %v1975, %v1974
    %v2016 = vpack.c.b16 %v1977, %v1976
    %v2017 = vpack.c.b16 %v1979, %v1978
    %v2018 = vpack.c.b16 %v1981, %v1980
    %v2019 = vpack.c.b16 %v1983, %v1982
    %v2020 = vpack.c.b16 %v1985, %v1984
    %v2021 = vpack.c.b16 %v1987, %v1986
    %v2022 = vpack.c.b16 %v1989, %v1988
    %v2023 = vpack.c.b16 %v1991, %v1990
    %2056 = vmatprep.subr.bf16.mxu0 0
    %2057 = vmatpush1.bf16.msra.mxu0 %v1992
    %2058 = vmatprep.subr.bf16.mxu0 0
    %2059 = vmatpush1.bf16.msra.mxu0 %v1993
    %2060 = vmatprep.subr.bf16.mxu0 0
    %2061 = vmatpush1.bf16.msra.mxu0 %v1994
    %2062 = vmatprep.subr.bf16.mxu0 0
    %2063 = vmatpush1.bf16.msra.mxu0 %v1995
    %2064 = vmatprep.subr.bf16.mxu0 0
    %2065 = vmatpush1.bf16.msra.mxu0 %v1996
    %2066 = vmatprep.subr.bf16.mxu0 0
    %2067 = vmatpush1.bf16.msra.mxu0 %v1997
    %2068 = vmatprep.subr.bf16.mxu0 0
    %2069 = vmatpush1.bf16.msra.mxu0 %v1998
    %2070 = vmatprep.subr.bf16.mxu0 0
    %2071 = vmatpush1.bf16.msra.mxu0 %v1999
    %2072 = vmatprep.subr.bf16.mxu0 0
    %2073 = vmatpush1.bf16.msra.mxu0 %v2000
    %2074 = vmatprep.subr.bf16.mxu0 0
    %2075 = vmatpush1.bf16.msra.mxu0 %v2001
    %2076 = vmatprep.subr.bf16.mxu0 0
    %2077 = vmatpush1.bf16.msra.mxu0 %v2002
    %2078 = vmatprep.subr.bf16.mxu0 0
    %2079 = vmatpush1.bf16.msra.mxu0 %v2003
    %2080 = vmatprep.subr.bf16.mxu0 0
    %2081 = vmatpush1.bf16.msra.mxu0 %v2004
    %2082 = vmatprep.subr.bf16.mxu0 0
    %2083 = vmatpush1.bf16.msra.mxu0 %v2005
    %2084 = vmatprep.subr.bf16.mxu0 0
    %2085 = vmatpush1.bf16.msra.mxu0 %v2006
    %2086 = vmatprep.subr.bf16.mxu0 0
    %2087 = vmatpush1.bf16.msra.mxu0 %v2007
    %2088 = vmatprep.mubr.bf16.mxu0 %v1790
    %2089 = vmatmul.mubr.bf16.gmra.mrb[0].mxu0 %v1789
    %v2090 = vpop.f32.mrb[0].mxu0
    %v2091 = vadd.f32 %v1862, %v2090
    %v2092 = vpop.f32.mrb[0].mxu0
    %v2093 = vpop.f32.mrb[0].mxu0
    %v2094 = vpop.f32.mrb[0].mxu0
    %2095 = vdwg.mxu0
    %2096 = vmatprep.subr.bf16.mxu0 0
    %2097 = vmatpush1.bf16.msra.mxu0 %v2008
    %2098 = vmatprep.subr.bf16.mxu0 0
    %2099 = vmatpush1.bf16.msra.mxu0 %v2009
    %2100 = vmatprep.subr.bf16.mxu0 0
    %2101 = vmatpush1.bf16.msra.mxu0 %v2010
    %2102 = vmatprep.subr.bf16.mxu0 0
    %2103 = vmatpush1.bf16.msra.mxu0 %v2011
    %2104 = vmatprep.subr.bf16.mxu0 0
    %2105 = vmatpush1.bf16.msra.mxu0 %v2012
    %2106 = vmatprep.subr.bf16.mxu0 0
    %2107 = vmatpush1.bf16.msra.mxu0 %v2013
    %2108 = vmatprep.subr.bf16.mxu0 0
    %2109 = vmatpush1.bf16.msra.mxu0 %v2014
    %2110 = vmatprep.subr.bf16.mxu0 0
    %2111 = vmatpush1.bf16.msra.mxu0 %v2015
    %2112 = vmatprep.subr.bf16.mxu0 0
    %2113 = vmatpush1.bf16.msra.mxu0 %v2016
    %2114 = vmatprep.subr.bf16.mxu0 0
    %2115 = vmatpush1.bf16.msra.mxu0 %v2017
    %2116 = vmatprep.subr.bf16.mxu0 0
    %2117 = vmatpush1.bf16.msra.mxu0 %v2018
    %2118 = vmatprep.subr.bf16.mxu0 0
    %2119 = vmatpush1.bf16.msra.mxu0 %v2019
    %2120 = vmatprep.subr.bf16.mxu0 0
    %2121 = vmatpush1.bf16.msra.mxu0 %v2020
    %2122 = vmatprep.subr.bf16.mxu0 0
    %2123 = vmatpush1.bf16.msra.mxu0 %v2021
    %2124 = vmatprep.subr.bf16.mxu0 0
    %2125 = vmatpush1.bf16.msra.mxu0 %v2022
    %2126 = vmatprep.subr.bf16.mxu0 0
    %2127 = vmatpush1.bf16.msra.mxu0 %v2023
    %2128 = vmatprep.mubr.bf16.mxu0 %v1792
    %2129 = vmatmul.mubr.bf16.gmra.mrb[0].mxu0 %v1791
    %v2130 = vpop.f32.mrb[0].mxu0
    %v2131 = vadd.f32 %v2091, %v2130
    %v2132 = vpop.f32.mrb[0].mxu0
    %v2133 = vpop.f32.mrb[0].mxu0
    %v2134 = vpop.f32.mrb[0].mxu0
    %2135 = vdwg.mxu0
    %v2136 = vadd.f32 %v1487, %v2131
    %v2137 = vld [vmem:[%s19] sm:$0x1]
    %v2138 = vld [vmem:[%s20] sm:$0x1]
    %2139 = vadd.xlane.f32.xlu0 %v2136
    %v2140 = vpop.xlane.xlu0 %2139
    %v2141 = vmul.f32 %v2140, %v1464
    %v2142 = vsub.f32 %v2136, %v2141
    %v2143 = vmul.f32 %v2142, %v2142
    %2144 = vadd.xlane.f32.xlu0 %v2143
    %v2145 = vpop.xlane.xlu0 %2144
    %v2146 = vmul.f32 %v2145, %v1464
    %v2147 = vadd.f32 %v2146, 1e-05
    %v2148 = vrsqrt.pop %v2147
    %v2149 = vmul.f32 %v2142, %v2148
    %v2151 = vlaneseq
    %v2152 = vshrl.u32 %v2151, 7
    %v2153 = vsub.s32 0, %v2152
    %v2154 = vrot.slane %v2137, %v2153
    %v2156 = vmul.f32 %v2149, %v2154
    %v2158 = vlaneseq
    %v2159 = vshrl.u32 %v2158, 7
    %v2160 = vsub.s32 0, %v2159
    %v2161 = vrot.slane %v2138, %v2160
    %v2163 = vadd.f32 %v2156, %v2161
    %v2164 = vpack.c.bf16 %v2163, %v2163
    %v2165 = vld [vmem:[#allocation11] sm:$0xff]
    %v2166 = vld [vmem:[#allocation11 + $0x8] sm:$0xff]
    %v2167 = vld [vmem:[#allocation11 + $0x10] sm:$0xff]
    %v2168 = vld [vmem:[#allocation11 + $0x18] sm:$0xff]
    %v2169 = vld [vmem:[#allocation11 + $0x20] sm:$0xff]
    %v2170 = vld [vmem:[#allocation11 + $0x28] sm:$0xff]
    %v2171 = vld [vmem:[#allocation11 + $0x30] sm:$0xff]
    %v2172 = vld [vmem:[#allocation11 + $0x38] sm:$0xff]
    %v2173 = vld [vmem:[#allocation11 + $0x40] sm:$0xff]
    %v2174 = vld [vmem:[#allocation11 + $0x48] sm:$0xff]
    %v2175 = vld [vmem:[#allocation11 + $0x50] sm:$0xff]
    %v2176 = vld [vmem:[#allocation11 + $0x58] sm:$0xff]
    %v2177 = vld [vmem:[#allocation11 + $0x60] sm:$0xff]
    %v2178 = vld [vmem:[#allocation11 + $0x68] sm:$0xff]
    %v2179 = vld [vmem:[#allocation11 + $0x70] sm:$0xff]
    %v2180 = vld [vmem:[#allocation11 + $0x78] sm:$0xff]
    %v2181 = vld [vmem:[%s22] sm:$0x3]
    %v2183 = vlaneseq
    %v2184 = vshrl.u32 %v2183, 7
    %v2185 = vsub.s32 0, %v2184
    %v2186 = vrot.slane %v2181, %v2185
    %v2187 = vlaneseq
    %v2188 = vshrl.u32 %v2187, 7
    %v2189 = vsub.s32 1, %v2188
    %v2190 = vrot.slane %v2181, %v2189
    %v2209 = vunpack.c.l.b16 %v2165
    %v2210 = vunpack.c.h.b16 %v2165
    %v2211 = vunpack.c.l.b16 %v2166
    %v2212 = vunpack.c.h.b16 %v2166
    %v2213 = vunpack.c.l.b16 %v2167
    %v2214 = vunpack.c.h.b16 %v2167
    %v2215 = vunpack.c.l.b16 %v2168
    %v2216 = vunpack.c.h.b16 %v2168
    %v2217 = vunpack.c.l.b16 %v2169
    %v2218 = vunpack.c.h.b16 %v2169
    %v2219 = vunpack.c.l.b16 %v2170
    %v2220 = vunpack.c.h.b16 %v2170
    %v2221 = vunpack.c.l.b16 %v2171
    %v2222 = vunpack.c.h.b16 %v2171
    %v2223 = vunpack.c.l.b16 %v2172
    %v2224 = vunpack.c.h.b16 %v2172
    %v2225 = vunpack.c.l.b16 %v2173
    %v2226 = vunpack.c.h.b16 %v2173
    %v2227 = vunpack.c.l.b16 %v2174
    %v2228 = vunpack.c.h.b16 %v2174
    %v2229 = vunpack.c.l.b16 %v2175
    %v2230 = vunpack.c.h.b16 %v2175
    %v2231 = vunpack.c.l.b16 %v2176
    %v2232 = vunpack.c.h.b16 %v2176
    %v2233 = vunpack.c.l.b16 %v2177
    %v2234 = vunpack.c.h.b16 %v2177
    %v2235 = vunpack.c.l.b16 %v2178
    %v2236 = vunpack.c.h.b16 %v2178
    %v2237 = vunpack.c.l.b16 %v2179
    %v2238 = vunpack.c.h.b16 %v2179
    %v2239 = vunpack.c.l.b16 %v2180
    %v2240 = vunpack.c.h.b16 %v2180
    %v2241 = vpack.c.b16 %v2211, %v2209
    %v2242 = vpack.c.b16 %v2212, %v2210
    %v2243 = vpack.c.b16 %v2215, %v2213
    %v2244 = vpack.c.b16 %v2216, %v2214
    %v2245 = vpack.c.b16 %v2219, %v2217
    %v2246 = vpack.c.b16 %v2220, %v2218
    %v2247 = vpack.c.b16 %v2223, %v2221
    %v2248 = vpack.c.b16 %v2224, %v2222
    %v2249 = vpack.c.b16 %v2227, %v2225
    %v2250 = vpack.c.b16 %v2228, %v2226
    %v2251 = vpack.c.b16 %v2231, %v2229
    %v2252 = vpack.c.b16 %v2232, %v2230
    %v2253 = vpack.c.b16 %v2235, %v2233
    %v2254 = vpack.c.b16 %v2236, %v2234
    %v2255 = vpack.c.b16 %v2239, %v2237
    %v2256 = vpack.c.b16 %v2240, %v2238
    %2273 = vmatprep.subr.bf16.mxu0 %v2242
    %2274 = vmatpush1.bf16.msra.mxu0 %v2241
    %2275 = vmatprep.subr.bf16.mxu0 %v2244
    %2276 = vmatpush1.bf16.msra.mxu0 %v2243
    %2277 = vmatprep.subr.bf16.mxu0 %v2246
    %2278 = vmatpush1.bf16.msra.mxu0 %v2245
    %2279 = vmatprep.subr.bf16.mxu0 %v2248
    %2280 = vmatpush1.bf16.msra.mxu0 %v2247
    %2281 = vmatprep.subr.bf16.mxu0 %v2250
    %2282 = vmatpush1.bf16.msra.mxu0 %v2249
    %2283 = vmatprep.subr.bf16.mxu0 %v2252
    %2284 = vmatpush1.bf16.msra.mxu0 %v2251
    %2285 = vmatprep.subr.bf16.mxu0 %v2254
    %2286 = vmatpush1.bf16.msra.mxu0 %v2253
    %2287 = vmatprep.subr.bf16.mxu0 %v2256
    %2288 = vmatpush1.bf16.msra.mxu0 %v2255
    %2289 = vmatprep.subr.bf16.mxu0 0
    %2290 = vmatpush1.bf16.msra.mxu0 0
    %2291 = vmatprep.subr.bf16.mxu0 0
    %2292 = vmatpush1.bf16.msra.mxu0 0
    %2293 = vmatprep.subr.bf16.mxu0 0
    %2294 = vmatpush1.bf16.msra.mxu0 0
    %2295 = vmatprep.subr.bf16.mxu0 0
    %2296 = vmatpush1.bf16.msra.mxu0 0
    %2297 = vmatprep.subr.bf16.mxu0 0
    %2298 = vmatpush1.bf16.msra.mxu0 0
    %2299 = vmatprep.subr.bf16.mxu0 0
    %2300 = vmatpush1.bf16.msra.mxu0 0
    %2301 = vmatprep.subr.bf16.mxu0 0
    %2302 = vmatpush1.bf16.msra.mxu0 0
    %2303 = vmatprep.subr.bf16.mxu0 0
    %2304 = vmatpush1.bf16.msra.mxu0 0
    %2305 = vmatprep.mubr.bf16.mxu0 0
    %2306 = vmatmul.mubr.bf16.gmra.mrb[0].mxu0 %v2164
    %v2307 = vpop.f32.mrb[0].mxu0
    %v2308 = vadd.f32 %v2186, %v2307
    %v2309 = vpop.f32.mrb[0].mxu0
    %v2310 = vadd.f32 %v2190, %v2309
    %v2311 = vpop.f32.mrb[0].mxu0
    %v2312 = vpop.f32.mrb[0].mxu0
    %2313 = vdwg.mxu0
    %2314 = vst [vmem:[#allocation12] sm:$0xff] %v2308
    %2315 = vst [vmem:[#allocation12 + $0x8] sm:$0xff] %v2310
    // Predicated region
    $region106: #{closed_call.4} parent=1 // pred_check
      _
    $region107: #{closed_call.4} parent=1 // pred_check_branch
      %2317 = sbr.rel (0) target = $region109
    $region108: #{closed_call.4} parent=1 // pred_region
      %s2319 = ssub.s32 256, 256
      %2320 = vsyncadd [#allocation5], %s2319
      %s2322 = sshll.u32 [#allocation12], 4
      %s2323 = int_to_ptr.vmem [resolvable:$true] %s2322
      %2325 = dma.vmem_to_hbm [thread:$0]  %s2323, 256, %s28, [#allocation5]
    $region109: #{closed_call.4} parent=1 // pred_fallthru
      _
    // Predicated region
    $region110: #{closed_call.4} parent=1 // pred_check
      _
    $region111: #{closed_call.4} parent=1 // pred_check_branch
      %2327 = sbr.rel (0) target = $region113
    $region112: #{closed_call.4} parent=1 // pred_region
      _
    $region113: #{closed_call.4} parent=1 // pred_fallthru
      _
    // Predicated region
    $region114: #{closed_call.4} parent=1 // pred_check
      _
    $region115: #{closed_call.4} parent=1 // pred_check_branch
      %2329 = sbr.rel (0) target = $region117
    $region116: #{closed_call.4} parent=1 // pred_region
      %2330 = dma.done [#allocation5], 256
    $region117: #{closed_call.4} parent=1 // pred_fallthru
      _
    // Predicated region
    $region118: #{closed_call.4} parent=1 // pred_check
      _
    $region119: #{closed_call.4} parent=1 // pred_check_branch
      %2332 = sbr.rel (0) target = $region121
    $region120: #{closed_call.4} parent=1 // pred_region
      _
    $region121: #{closed_call.4} parent=1 // pred_fallthru
      _
    %2333 = vsyncpa [#allocation4], 1
    %2334 = vsyncpa [#allocation7], 1
    %2335 = vsyncpa [#allocation10], 1
    %2336 = vsyncpa [#allocation5], 1

</llo_original>
